<compile_context>
chip_gen: v5e
topology: v5e:2x2
jax: 0.10.0
libtpu: 0.0.40
codegen_flags: <defaults>
</compile_context>

<pallas_src>
import functools

import numpy as np
import jax
import jax.numpy as jnp
from jax.experimental import pallas as pl
from jax.experimental.pallas import tpu as pltpu


_PAD = 8   # top pad rows of the VMEM scratches => aligned interior writes


def _elu(x):
    return jnp.where(x > 0, x, jnp.exp(x) - 1.0)


# ----------------------------------------------------------------------------
# Fused kernel: one grid step == `images_per_block` images.
# ----------------------------------------------------------------------------
def _up_transition_kernel(x_ref, a_ref, bup_ref, bn0s_ref, bn0b_ref,
                          v_ref, bns_ref, bnb_ref, out_ref,
                          xp_ref, hp_ref, *, precision):
    """Layouts (all 2-D, lane-fused):
      x_ref  : (Nb, H, W*Cin)        input image rows
      out_ref: (Nb, H, 2*SW*C)       row-PAIR layout: lanes [0:SW*C] = image row
                                     2i, lanes [SW*C:2*SW*C] = image row 2i+1
      xp_ref : (_PAD+H+1, W*Cin)     vertically zero-padded input scratch
      hp_ref : (_PAD+H+1, 2*SW*C)    vertically zero-padded hidden scratch
    Both convs are banded matmuls over the fused lane dim, accumulated over
    3 vertical taps; width padding is baked into the banded weights.
    """
    f32 = jnp.float32
    nb_images, H, _ = x_ref.shape
    LP = out_ref.shape[-1]                       # 2 * SW * C lanes per row-pair
    n_layers = bns_ref.shape[0]

    # Zero the vertical pad rows.  Done every grid step (not under
    # pl.when(pid == 0)) because dimension_semantics=("parallel",) gives each
    # megacore TensorCore its own scratch instance.  One aligned 8-row store
    # plus one 1-row store per scratch; interiors are overwritten below.
    xp_ref[0:_PAD, :] = jnp.zeros((_PAD, xp_ref.shape[-1]), f32)
    xp_ref[_PAD + H:_PAD + H + 1, :] = jnp.zeros((1, xp_ref.shape[-1]), f32)
    hp_ref[0:_PAD, :] = jnp.zeros((_PAD, LP), f32)
    hp_ref[_PAD + H:_PAD + H + 1, :] = jnp.zeros((1, LP), f32)

    def band_mm(src_ref, w_ref, taps):
        # sum_t  src[interior + (t - 1)] @ w[taps[t]]   (vertical taps -1,0,+1)
        acc = None
        for t in range(3):
            lhs = src_ref[_PAD - 1 + t:_PAD - 1 + t + H, :]
            term = jnp.dot(lhs, w_ref[taps[t]],
                           preferred_element_type=f32, precision=precision)
            acc = term if acc is None else acc + term
        return acc

    for nb in range(nb_images):
        # ---- stage 1: ConvTranspose2d(k=4, s=2, p=1) -------------------------
        # out row-pair m = x[m-1] @ A0 + x[m] @ A1 + x[m+1] @ A2 + bias
        xp_ref[_PAD:_PAD + H, :] = x_ref[nb].astype(f32)   # aligned interior
        out1 = band_mm(xp_ref, a_ref, (0, 1, 2)) + bup_ref[...]

        # ---- stage 2: BN -> [ELU -> grouped 3x3 conv -> BN] * layer ----------
        h = out1 * bn0s_ref[...] + bn0b_ref[...]           # eval-mode BatchNorm
        for i in range(n_layers):
            hp_ref[_PAD:_PAD + H, :] = _elu(h)             # aligned interior
            conv = band_mm(hp_ref, v_ref, (3 * i, 3 * i + 1, 3 * i + 2))
            # grouped-conv bias is pre-folded into bnb (BN shift) in the wrapper
            h = conv * bns_ref[i:i + 1, :] + bnb_ref[i:i + 1, :]

        # ---- stage 3: residual + ELU, single lane-dense HBM store ------------
        out_ref[nb] = _elu(out1 + h).astype(out_ref.dtype)


# ----------------------------------------------------------------------------
# Wrapper
# ----------------------------------------------------------------------------
def up_transition_forward(x_nhwc, params, *,
                          precision=jax.lax.Precision.DEFAULT,
                          images_per_block=1):
    """Fused UpTransition forward (last=False); NHWC in, NHWC out.

    BatchNorm is eval-mode: running statistics are folded into per-channel
    scale/shift (same as nn.BatchNorm2d.eval()).
    """
    N, H, W, Cin = x_nhwc.shape
    SW = 2 * W
    LP = params["a_band"].shape[-1]              # 2 * SW * C
    C = LP // (2 * SW)
    layer = params["bn_scale_t"].shape[0]
    Nb = images_per_block
    assert N % Nb == 0, "batch must be divisible by images_per_block"

    x2d = x_nhwc.reshape(N, H, W * Cin)          # lane-fused input rows

    kern = functools.partial(_up_transition_kernel, precision=precision)

    out = pl.pallas_call(
        kern,
        out_shape=jax.ShapeDtypeStruct((N, H, LP), jnp.float32),
        grid_spec=pltpu.PrefetchScalarGridSpec(
            num_scalar_prefetch=0,
            grid=(N // Nb,),                     # image(s) per grid step
            in_specs=[
                pl.BlockSpec((Nb, H, W * Cin), lambda n: (n, 0, 0)),
                pl.BlockSpec((3, W * Cin, LP), lambda n: (0, 0, 0)),
                pl.BlockSpec((1, LP), lambda n: (0, 0)),
                pl.BlockSpec((1, LP), lambda n: (0, 0)),
                pl.BlockSpec((1, LP), lambda n: (0, 0)),
                pl.BlockSpec((3 * layer, LP, LP), lambda n: (0, 0, 0)),
                pl.BlockSpec((layer, LP), lambda n: (0, 0)),
                pl.BlockSpec((layer, LP), lambda n: (0, 0)),
            ],
            out_specs=pl.BlockSpec((Nb, H, LP), lambda n: (n, 0, 0)),
            scratch_shapes=[
                pltpu.VMEM((_PAD + H + 1, W * Cin), jnp.float32),   # padded x
                pltpu.VMEM((_PAD + H + 1, LP), jnp.float32),        # padded h
            ],
        ),
        compiler_params=pltpu.CompilerParams(
            # batch axis is independent -> megacore-shardable on v7x
            dimension_semantics=("parallel",),
            # padded-layout footprint ~3.5 MiB at test sizes; explicit limit so
            # larger configs fail loudly instead of silently thrashing on v7x.
            vmem_limit_bytes=32 * 1024 * 1024,
        ),
    )(x2d, params["a_band"], params["b_up_t"], params["bn0_scale_t"],
      params["bn0_shift_t"], params["v_band"], params["bn_scale_t"],
      params["bn_shift_t"])

    # (N, H, 2*SW*C) -> (N, 2H, SW, C) is a pure row-major reshape (no data
    # movement): lanes [0:SW*C] of kernel row i are image row 2i, rest 2i+1.
    return out.reshape(N, 2 * H, SW, C)


# ----------------------------------------------------------------------------
# Host-side weight folding (banded / Toeplitz forms)
# ----------------------------------------------------------------------------
def _fold_deconv(w_up, W):
    """ConvTranspose2d(k=4, s=2, p=1) -> 3 banded weights A[t].

    Output row-pair m = x[m-1] @ A[0] + x[m] @ A[1] + x[m+1] @ A[2] + bias,
    with x rows in (W*Cin) lane layout and the output in row-pair layout.
    Horizontal edge truncation (padding=1) is baked into the band.
    """
    Cin, C = w_up.shape[0], w_up.shape[1]
    SW = 2 * W
    A = np.zeros((3, W * Cin, 2 * SW * C), np.float32)
    # vertical: output row 2m+py reads input row m-1+t through kernel row ky
    row_taps = [(0, 0, 3), (1, 0, 1), (1, 1, 2), (2, 1, 0)]    # (t, py, ky)
    # horizontal: output col 2n+px reads input col n+dix through kernel col kx
    col_taps = [(-1, 0, 3), (0, 0, 1), (0, 1, 2), (1, 1, 0)]   # (dix, px, kx)
    for t, py, ky in row_taps:
        for dix, px, kx in col_taps:
            for n in range(W):
                ix = n + dix
                if ix < 0 or ix >= W:
                    continue
                ox = 2 * n + px
                A[t, ix * Cin:(ix + 1) * Cin,
                  py * SW * C + ox * C: py * SW * C + (ox + 1) * C] += \
                    w_up[:, :, ky, kx]
    return A


def _fold_conv3(w3_l, SW):
    """One grouped Conv2d(C, C, 3, pad=1, groups=2) layer -> 3 banded weights
    acting on the row-pair lane layout:  out pair o = h[o-1]@V0 + h[o]@V1 + h[o+1]@V2.
    """
    C, half = w3_l.shape[0], w3_l.shape[1]
    V = np.zeros((3, 2 * SW * C, 2 * SW * C), np.float32)
    # (pair tap t, source row-half s, dest row-half d, kernel row ky)
    combos = [(0, 1, 0, 0),
              (1, 0, 0, 1), (1, 1, 0, 2), (1, 0, 1, 0), (1, 1, 1, 1),
              (2, 0, 1, 2)]
    groups = C // half
    for t, s, d, ky in combos:
        for x in range(SW):                     # output column
            for kx in range(3):
                xs = x + kx - 1                 # input column (padding=1)
                if xs < 0 or xs >= SW:
                    continue
                for g in range(groups):
                    V[t,
                      s * SW * C + xs * C + g * half:
                      s * SW * C + xs * C + (g + 1) * half,
                      d * SW * C + x * C + g * half:
                      d * SW * C + x * C + (g + 1) * half] += \
                        w3_l[g * half:(g + 1) * half, :, ky, kx].T
    return V


# ----------------------------------------------------------------------------
# Deterministic parameter construction (shapes match the PyTorch module)
# ----------------------------------------------------------------------------
def make_params(key, inchan, outchan, layer, W):
    assert outchan % 2 == 0, "groups=2 needs even outchan"
    ks = jax.random.split(key, 12)
    Cin, C, L = inchan, outchan, layer
    half = C // 2
    SW = 2 * W
    LP = 2 * SW * C
    eps = 1e-5

    # ConvTranspose2d weight: PyTorch layout (in, out, kH, kW)
    w_up = 0.1 * jax.random.normal(ks[0], (Cin, C, 4, 4), jnp.float32)
    b_up = 0.1 * jax.random.normal(ks[1], (C,), jnp.float32)

    g0 = 1.0 + 0.1 * jax.random.normal(ks[2], (C,), jnp.float32)
    be0 = 0.1 * jax.random.normal(ks[3], (C,), jnp.float32)
    m0 = 0.1 * jax.random.normal(ks[4], (C,), jnp.float32)
    v0 = 1.0 + 0.1 * jnp.abs(jax.random.normal(ks[5], (C,), jnp.float32))

    # grouped Conv2d weights: PyTorch layout (out, in/groups, 3, 3)
    w3 = 0.1 * jax.random.normal(ks[6], (L, C, half, 3, 3), jnp.float32)
    b3 = 0.1 * jax.random.normal(ks[7], (L, C), jnp.float32)

    gl = 1.0 + 0.1 * jax.random.normal(ks[8], (L, C), jnp.float32)
    bl = 0.1 * jax.random.normal(ks[9], (L, C), jnp.float32)
    ml = 0.1 * jax.random.normal(ks[10], (L, C), jnp.float32)
    vl = 1.0 + 0.1 * jnp.abs(jax.random.normal(ks[11], (L, C), jnp.float32))

    w_up_np, w3_np, b3_np = np.asarray(w_up), np.asarray(w3), np.asarray(b3)

    a_band = _fold_deconv(w_up_np, W)                                 # (3, W*Cin, LP)
    v_band = np.concatenate([_fold_conv3(w3_np[i], SW) for i in range(L)],
                            axis=0)                                   # (3L, LP, LP)

    def bn_affine(gamma, beta, mean, var):
        scale = np.asarray(gamma / jnp.sqrt(var + eps), np.float32)
        shift = np.asarray(beta, np.float32) - np.asarray(mean, np.float32) * scale
        return scale, shift

    bn0_scale, bn0_shift = bn_affine(g0, be0, m0, v0)
    bn_scale, bn_shift = bn_affine(gl, bl, ml, vl)
    # fold conv bias into eval-mode BN shift: (x + b)*s + t = x*s + (b*s + t)
    bn_shift_f = b3_np * bn_scale + bn_shift

    def tile_lanes(v):      # per-channel (..., C) -> per-lane (..., 2*SW*C)
        return np.tile(np.asarray(v, np.float32), 2 * SW)

    params = dict(
        a_band=jnp.asarray(a_band),
        v_band=jnp.asarray(v_band),
        b_up_t=jnp.asarray(tile_lanes(b_up).reshape(1, LP)),
        bn0_scale_t=jnp.asarray(tile_lanes(bn0_scale).reshape(1, LP)),
        bn0_shift_t=jnp.asarray(tile_lanes(bn0_shift).reshape(1, LP)),
        bn_scale_t=jnp.asarray(tile_lanes(bn_scale)),                 # (L, LP)
        bn_shift_t=jnp.asarray(tile_lanes(bn_shift_f)),               # (L, LP)
    )
    raw = dict(w_up=w_up_np, b_up=np.asarray(b_up), w3=w3_np, b3=b3_np,
               bn0_scale=bn0_scale, bn0_shift=bn0_shift,
               bn_scale=bn_scale, bn_shift=bn_shift)
    return params, raw


# ----------------------------------------------------------------------------
# Pure-numpy reference (mirrors PyTorch semantics, NHWC)
# ----------------------------------------------------------------------------
def ref_forward(x_nhwc, raw, layer):
    x = np.asarray(x_nhwc, np.float32)
    N, H, W, _ = x.shape
    W_up, b_up = raw["w_up"], raw["b_up"]
    C = b_up.shape[0]
    half = C // 2

    # ConvTranspose2d: tmp[2i+ky, 2j+kx] += x[i, j] . W[:, :, ky, kx], crop p=1
    tmp = np.zeros((N, 2 * H + 2, 2 * W + 2, C), np.float32)
    for ky in range(4):
        for kx in range(4):
            contrib = np.einsum("nhwc,cd->nhwd", x, W_up[:, :, ky, kx])
            tmp[:, ky:ky + 2 * H:2, kx:kx + 2 * W:2, :] += contrib
    out1 = tmp[:, 1:1 + 2 * H, 1:1 + 2 * W, :] + b_up

    def elu(a):
        return np.where(a > 0, a, np.exp(a) - 1.0)

    h = out1 * raw["bn0_scale"] + raw["bn0_shift"]
    for i in range(layer):
        e = elu(h)
        hp = np.pad(e, ((0, 0), (1, 1), (1, 1), (0, 0)))
        conv = np.zeros_like(out1) + raw["b3"][i]
        for dy in range(3):
            for dx in range(3):
                win = hp[:, dy:dy + 2 * H, dx:dx + 2 * W, :]
                conv[..., :half] += win[..., :half] @ raw["w3"][i, :half, :, dy, dx].T
                conv[..., half:] += win[..., half:] @ raw["w3"][i, half:, :, dy, dx].T
        h = conv * raw["bn_scale"][i] + raw["bn_shift"][i]
    return elu(out1 + h)


if __name__ == "__main__":
    # (N, H, W, inchan, outchan, layer)
    configs = [
        (2, 16, 16, 4, 4, 2),   # HBM output rows = 256 dense lanes (2 full tiles)
        (1, 12, 10, 6, 4, 1),   # unaligned spatial, Cin != outchan, single layer
    ]
    key = jax.random.PRNGKey(0)
    for (N, H, W, inchan, outchan, layer) in configs:
        key, kx, kp = jax.random.split(key, 3)
        x_nchw = jax.random.normal(kx, (N, inchan, H, W), jnp.float32)   # NCHW
        x_nhwc = jnp.transpose(x_nchw, (0, 2, 3, 1))                     # kernel layout

        params, raw = make_params(kp, inchan, outchan, layer, W)
        ref = ref_forward(np.asarray(x_nhwc), raw, layer)

        # Fast path: DEFAULT precision = single-pass bf16 MXU operands, checked
        # with a loose tolerance.  HIGHEST proves the banded-weight fold is
        # exact (1e-5 vs. the f64-free numpy reference).
        for prec, tol in ((jax.lax.Precision.DEFAULT, 1e-1),
                          (jax.lax.Precision.HIGHEST, 1e-5)):
            out_nhwc = jax.block_until_ready(
                up_transition_forward(x_nhwc, params, precision=prec))
            np.testing.assert_allclose(np.asarray(out_nhwc), ref,
                                       rtol=tol, atol=tol)

        out_nchw = jnp.transpose(out_nhwc, (0, 3, 1, 2))                 # back to NCHW
        assert out_nchw.shape == (N, outchan, 2 * H, 2 * W)
    print("KERNEL_OK")
</pallas_src>

<mosaic_0001>
module attributes {stable_mosaic.version = 11 : i64} {
  func.func @_up_transition_kernel(%arg0: i32, %arg1: memref<1x16x64xf32, #tpu.memory_space<vmem>>, %arg2: memref<3x64x256xf32, #tpu.memory_space<vmem>>, %arg3: memref<1x256xf32, #tpu.memory_space<vmem>>, %arg4: memref<1x256xf32, #tpu.memory_space<vmem>>, %arg5: memref<1x256xf32, #tpu.memory_space<vmem>>, %arg6: memref<6x256x256xf32, #tpu.memory_space<vmem>>, %arg7: memref<2x256xf32, #tpu.memory_space<vmem>>, %arg8: memref<2x256xf32, #tpu.memory_space<vmem>>, %arg9: memref<1x16x256xf32, #tpu.memory_space<vmem>>, %arg10: memref<25x64xf32, #tpu.memory_space<vmem>>, %arg11: memref<25x256xf32, #tpu.memory_space<vmem>>) attributes {dimension_semantics = [#tpu.dimension_semantics<parallel>], iteration_bounds = array<i64: 2>, scalar_prefetch = 0 : i64, scratch_operands = 2 : i64, tpu.core_type = #tpu.core_type<tc>, window_params = [{transform_indices = @transform_0, window_bounds = array<i64: 1, 16, 64>}, {pipeline_mode = #tpu.pipeline_mode<synchronous>, transform_indices = @transform_1, window_bounds = array<i64: 3, 64, 256>}, {pipeline_mode = #tpu.pipeline_mode<synchronous>, transform_indices = @transform_2, window_bounds = array<i64: 1, 256>}, {pipeline_mode = #tpu.pipeline_mode<synchronous>, transform_indices = @transform_3, window_bounds = array<i64: 1, 256>}, {pipeline_mode = #tpu.pipeline_mode<synchronous>, transform_indices = @transform_4, window_bounds = array<i64: 1, 256>}, {pipeline_mode = #tpu.pipeline_mode<synchronous>, transform_indices = @transform_5, window_bounds = array<i64: 6, 256, 256>}, {pipeline_mode = #tpu.pipeline_mode<synchronous>, transform_indices = @transform_6, window_bounds = array<i64: 2, 256>}, {pipeline_mode = #tpu.pipeline_mode<synchronous>, transform_indices = @transform_7, window_bounds = array<i64: 2, 256>}, {transform_indices = @transform_8, window_bounds = array<i64: 1, 16, 256>}]} {
    %cst = arith.constant 0.000000e+00 : f32
    %0 = vector.broadcast %cst : f32 to vector<8x64xf32>
    %c0 = arith.constant 0 : index
    %c0_0 = arith.constant 0 : index
    %1 = vector.load %arg10[%c0, %c0_0] : memref<25x64xf32, #tpu.memory_space<vmem>>, vector<8x64xf32>
    tpu.vector_store %arg10[%c0, %c0_0], %0 {strides = array<i32>} : memref<25x64xf32, #tpu.memory_space<vmem>>, vector<8x64xf32>,
    %cst_1 = arith.constant 0.000000e+00 : f32
    %2 = vector.broadcast %cst_1 : f32 to vector<1x64xf32>
    %c24 = arith.constant 24 : index
    %c0_2 = arith.constant 0 : index
    %3 = vector.load %arg10[%c24, %c0_2] : memref<25x64xf32, #tpu.memory_space<vmem>>, vector<1x64xf32>
    tpu.vector_store %arg10[%c24, %c0_2], %2 {strides = array<i32>} : memref<25x64xf32, #tpu.memory_space<vmem>>, vector<1x64xf32>,
    %cst_3 = arith.constant 0.000000e+00 : f32
    %4 = vector.broadcast %cst_3 : f32 to vector<8x256xf32>
    %c0_4 = arith.constant 0 : index
    %c0_5 = arith.constant 0 : index
    %5 = vector.load %arg11[%c0_4, %c0_5] : memref<25x256xf32, #tpu.memory_space<vmem>>, vector<8x256xf32>
    tpu.vector_store %arg11[%c0_4, %c0_5], %4 {strides = array<i32>} : memref<25x256xf32, #tpu.memory_space<vmem>>, vector<8x256xf32>,
    %cst_6 = arith.constant 0.000000e+00 : f32
    %6 = vector.broadcast %cst_6 : f32 to vector<1x256xf32>
    %c24_7 = arith.constant 24 : index
    %c0_8 = arith.constant 0 : index
    %7 = vector.load %arg11[%c24_7, %c0_8] : memref<25x256xf32, #tpu.memory_space<vmem>>, vector<1x256xf32>
    tpu.vector_store %arg11[%c24_7, %c0_8], %6 {strides = array<i32>} : memref<25x256xf32, #tpu.memory_space<vmem>>, vector<1x256xf32>,
    %c0_9 = arith.constant 0 : index
    %c0_10 = arith.constant 0 : index
    %c0_11 = arith.constant 0 : index
    %8 = vector.load %arg1[%c0_9, %c0_10, %c0_11] : memref<1x16x64xf32, #tpu.memory_space<vmem>>, vector<1x16x64xf32>
    %9 = vector.shape_cast %8 : vector<1x16x64xf32> to vector<16x64xf32>
    %c8 = arith.constant 8 : index
    %c0_12 = arith.constant 0 : index
    %10 = vector.load %arg10[%c8, %c0_12] : memref<25x64xf32, #tpu.memory_space<vmem>>, vector<16x64xf32>
    tpu.vector_store %arg10[%c8, %c0_12], %9 {strides = array<i32>} : memref<25x64xf32, #tpu.memory_space<vmem>>, vector<16x64xf32>,
    %c7 = arith.constant 7 : index
    %c0_13 = arith.constant 0 : index
    %11 = vector.load %arg10[%c7, %c0_13] : memref<25x64xf32, #tpu.memory_space<vmem>>, vector<16x64xf32>
    %c0_14 = arith.constant 0 : index
    %c0_15 = arith.constant 0 : index
    %c0_16 = arith.constant 0 : index
    %12 = vector.load %arg2[%c0_14, %c0_15, %c0_16] : memref<3x64x256xf32, #tpu.memory_space<vmem>>, vector<1x64x256xf32>
    %13 = vector.shape_cast %12 : vector<1x64x256xf32> to vector<64x256xf32>
    %cst_17 = arith.constant dense<0.000000e+00> : vector<16x256xf32>
    %14 = tpu.matmul %11, %13, %cst_17 {dimension_numbers = #tpu.dot_dimension_numbers<[1], [0], [0], [1], [0, 0, 1, 1], [], []>} : vector<16x64xf32>, vector<64x256xf32>, vector<16x256xf32> -> vector<16x256xf32>
    %c8_18 = arith.constant 8 : index
    %c0_19 = arith.constant 0 : index
    %15 = vector.load %arg10[%c8_18, %c0_19] : memref<25x64xf32, #tpu.memory_space<vmem>>, vector<16x64xf32>
    %c1 = arith.constant 1 : index
    %c0_20 = arith.constant 0 : index
    %c0_21 = arith.constant 0 : index
    %16 = vector.load %arg2[%c1, %c0_20, %c0_21] : memref<3x64x256xf32, #tpu.memory_space<vmem>>, vector<1x64x256xf32>
    %17 = vector.shape_cast %16 : vector<1x64x256xf32> to vector<64x256xf32>
    %cst_22 = arith.constant dense<0.000000e+00> : vector<16x256xf32>
    %18 = tpu.matmul %15, %17, %cst_22 {dimension_numbers = #tpu.dot_dimension_numbers<[1], [0], [0], [1], [0, 0, 1, 1], [], []>} : vector<16x64xf32>, vector<64x256xf32>, vector<16x256xf32> -> vector<16x256xf32>
    %19 = arith.addf %14, %18 : vector<16x256xf32>
    %c9 = arith.constant 9 : index
    %c0_23 = arith.constant 0 : index
    %20 = vector.load %arg10[%c9, %c0_23] : memref<25x64xf32, #tpu.memory_space<vmem>>, vector<16x64xf32>
    %c2 = arith.constant 2 : index
    %c0_24 = arith.constant 0 : index
    %c0_25 = arith.constant 0 : index
    %21 = vector.load %arg2[%c2, %c0_24, %c0_25] : memref<3x64x256xf32, #tpu.memory_space<vmem>>, vector<1x64x256xf32>
    %22 = vector.shape_cast %21 : vector<1x64x256xf32> to vector<64x256xf32>
    %cst_26 = arith.constant dense<0.000000e+00> : vector<16x256xf32>
    %23 = tpu.matmul %20, %22, %cst_26 {dimension_numbers = #tpu.dot_dimension_numbers<[1], [0], [0], [1], [0, 0, 1, 1], [], []>} : vector<16x64xf32>, vector<64x256xf32>, vector<16x256xf32> -> vector<16x256xf32>
    %24 = arith.addf %19, %23 : vector<16x256xf32>
    %c0_27 = arith.constant 0 : index
    %c0_28 = arith.constant 0 : index
    %25 = vector.load %arg3[%c0_27, %c0_28] : memref<1x256xf32, #tpu.memory_space<vmem>>, vector<1x256xf32>
    %26 = vector.broadcast %25 : vector<1x256xf32> to vector<16x256xf32>
    %27 = arith.addf %24, %26 : vector<16x256xf32>
    %c0_29 = arith.constant 0 : index
    %c0_30 = arith.constant 0 : index
    %28 = vector.load %arg4[%c0_29, %c0_30] : memref<1x256xf32, #tpu.memory_space<vmem>>, vector<1x256xf32>
    %29 = vector.broadcast %28 : vector<1x256xf32> to vector<16x256xf32>
    %30 = arith.mulf %27, %29 : vector<16x256xf32>
    %c0_31 = arith.constant 0 : index
    %c0_32 = arith.constant 0 : index
    %31 = vector.load %arg5[%c0_31, %c0_32] : memref<1x256xf32, #tpu.memory_space<vmem>>, vector<1x256xf32>
    %32 = vector.broadcast %31 : vector<1x256xf32> to vector<16x256xf32>
    %33 = arith.addf %30, %32 : vector<16x256xf32>
    %cst_33 = arith.constant 0.000000e+00 : f32
    %34 = vector.broadcast %cst_33 : f32 to vector<16x256xf32>
    %35 = arith.cmpf ogt, %33, %34 : vector<16x256xf32>
    %36 = math.exp %33 : vector<16x256xf32>
    %cst_34 = arith.constant 1.000000e+00 : f32
    %37 = vector.broadcast %cst_34 : f32 to vector<16x256xf32>
    %38 = arith.subf %36, %37 : vector<16x256xf32>
    %39 = arith.select %35, %33, %38 : vector<16x256xi1>, vector<16x256xf32>
    %c8_35 = arith.constant 8 : index
    %c0_36 = arith.constant 0 : index
    %40 = vector.load %arg11[%c8_35, %c0_36] : memref<25x256xf32, #tpu.memory_space<vmem>>, vector<16x256xf32>
    tpu.vector_store %arg11[%c8_35, %c0_36], %39 {strides = array<i32>} : memref<25x256xf32, #tpu.memory_space<vmem>>, vector<16x256xf32>,
    %c7_37 = arith.constant 7 : index
    %c0_38 = arith.constant 0 : index
    %41 = vector.load %arg11[%c7_37, %c0_38] : memref<25x256xf32, #tpu.memory_space<vmem>>, vector<16x256xf32>
    %c0_39 = arith.constant 0 : index
    %c0_40 = arith.constant 0 : index
    %c0_41 = arith.constant 0 : index
    %42 = vector.load %arg6[%c0_39, %c0_40, %c0_41] : memref<6x256x256xf32, #tpu.memory_space<vmem>>, vector<1x256x256xf32>
    %43 = vector.shape_cast %42 : vector<1x256x256xf32> to vector<256x256xf32>
    %cst_42 = arith.constant dense<0.000000e+00> : vector<16x256xf32>
    %44 = tpu.matmul %41, %43, %cst_42 {dimension_numbers = #tpu.dot_dimension_numbers<[1], [0], [0], [1], [0, 0, 1, 1], [], []>} : vector<16x256xf32>, vector<256x256xf32>, vector<16x256xf32> -> vector<16x256xf32>
    %c8_43 = arith.constant 8 : index
    %c0_44 = arith.constant 0 : index
    %45 = vector.load %arg11[%c8_43, %c0_44] : memref<25x256xf32, #tpu.memory_space<vmem>>, vector<16x256xf32>
    %c1_45 = arith.constant 1 : index
    %c0_46 = arith.constant 0 : index
    %c0_47 = arith.constant 0 : index
    %46 = vector.load %arg6[%c1_45, %c0_46, %c0_47] : memref<6x256x256xf32, #tpu.memory_space<vmem>>, vector<1x256x256xf32>
    %47 = vector.shape_cast %46 : vector<1x256x256xf32> to vector<256x256xf32>
    %cst_48 = arith.constant dense<0.000000e+00> : vector<16x256xf32>
    %48 = tpu.matmul %45, %47, %cst_48 {dimension_numbers = #tpu.dot_dimension_numbers<[1], [0], [0], [1], [0, 0, 1, 1], [], []>} : vector<16x256xf32>, vector<256x256xf32>, vector<16x256xf32> -> vector<16x256xf32>
    %49 = arith.addf %44, %48 : vector<16x256xf32>
    %c9_49 = arith.constant 9 : index
    %c0_50 = arith.constant 0 : index
    %50 = vector.load %arg11[%c9_49, %c0_50] : memref<25x256xf32, #tpu.memory_space<vmem>>, vector<16x256xf32>
    %c2_51 = arith.constant 2 : index
    %c0_52 = arith.constant 0 : index
    %c0_53 = arith.constant 0 : index
    %51 = vector.load %arg6[%c2_51, %c0_52, %c0_53] : memref<6x256x256xf32, #tpu.memory_space<vmem>>, vector<1x256x256xf32>
    %52 = vector.shape_cast %51 : vector<1x256x256xf32> to vector<256x256xf32>
    %cst_54 = arith.constant dense<0.000000e+00> : vector<16x256xf32>
    %53 = tpu.matmul %50, %52, %cst_54 {dimension_numbers = #tpu.dot_dimension_numbers<[1], [0], [0], [1], [0, 0, 1, 1], [], []>} : vector<16x256xf32>, vector<256x256xf32>, vector<16x256xf32> -> vector<16x256xf32>
    %54 = arith.addf %49, %53 : vector<16x256xf32>
    %c0_55 = arith.constant 0 : index
    %c0_56 = arith.constant 0 : index
    %55 = vector.load %arg7[%c0_55, %c0_56] : memref<2x256xf32, #tpu.memory_space<vmem>>, vector<1x256xf32>
    %56 = vector.broadcast %55 : vector<1x256xf32> to vector<16x256xf32>
    %57 = arith.mulf %54, %56 : vector<16x256xf32>
    %c0_57 = arith.constant 0 : index
    %c0_58 = arith.constant 0 : index
    %58 = vector.load %arg8[%c0_57, %c0_58] : memref<2x256xf32, #tpu.memory_space<vmem>>, vector<1x256xf32>
    %59 = vector.broadcast %58 : vector<1x256xf32> to vector<16x256xf32>
    %60 = arith.addf %57, %59 : vector<16x256xf32>
    %cst_59 = arith.constant 0.000000e+00 : f32
    %61 = vector.broadcast %cst_59 : f32 to vector<16x256xf32>
    %62 = arith.cmpf ogt, %60, %61 : vector<16x256xf32>
    %63 = math.exp %60 : vector<16x256xf32>
    %cst_60 = arith.constant 1.000000e+00 : f32
    %64 = vector.broadcast %cst_60 : f32 to vector<16x256xf32>
    %65 = arith.subf %63, %64 : vector<16x256xf32>
    %66 = arith.select %62, %60, %65 : vector<16x256xi1>, vector<16x256xf32>
    %c8_61 = arith.constant 8 : index
    %c0_62 = arith.constant 0 : index
    %67 = vector.load %arg11[%c8_61, %c0_62] : memref<25x256xf32, #tpu.memory_space<vmem>>, vector<16x256xf32>
    tpu.vector_store %arg11[%c8_61, %c0_62], %66 {strides = array<i32>} : memref<25x256xf32, #tpu.memory_space<vmem>>, vector<16x256xf32>,
    %c7_63 = arith.constant 7 : index
    %c0_64 = arith.constant 0 : index
    %68 = vector.load %arg11[%c7_63, %c0_64] : memref<25x256xf32, #tpu.memory_space<vmem>>, vector<16x256xf32>
    %c3 = arith.constant 3 : index
    %c0_65 = arith.constant 0 : index
    %c0_66 = arith.constant 0 : index
    %69 = vector.load %arg6[%c3, %c0_65, %c0_66] : memref<6x256x256xf32, #tpu.memory_space<vmem>>, vector<1x256x256xf32>
    %70 = vector.shape_cast %69 : vector<1x256x256xf32> to vector<256x256xf32>
    %cst_67 = arith.constant dense<0.000000e+00> : vector<16x256xf32>
    %71 = tpu.matmul %68, %70, %cst_67 {dimension_numbers = #tpu.dot_dimension_numbers<[1], [0], [0], [1], [0, 0, 1, 1], [], []>} : vector<16x256xf32>, vector<256x256xf32>, vector<16x256xf32> -> vector<16x256xf32>
    %c8_68 = arith.constant 8 : index
    %c0_69 = arith.constant 0 : index
    %72 = vector.load %arg11[%c8_68, %c0_69] : memref<25x256xf32, #tpu.memory_space<vmem>>, vector<16x256xf32>
    %c4 = arith.constant 4 : index
    %c0_70 = arith.constant 0 : index
    %c0_71 = arith.constant 0 : index
    %73 = vector.load %arg6[%c4, %c0_70, %c0_71] : memref<6x256x256xf32, #tpu.memory_space<vmem>>, vector<1x256x256xf32>
    %74 = vector.shape_cast %73 : vector<1x256x256xf32> to vector<256x256xf32>
    %cst_72 = arith.constant dense<0.000000e+00> : vector<16x256xf32>
    %75 = tpu.matmul %72, %74, %cst_72 {dimension_numbers = #tpu.dot_dimension_numbers<[1], [0], [0], [1], [0, 0, 1, 1], [], []>} : vector<16x256xf32>, vector<256x256xf32>, vector<16x256xf32> -> vector<16x256xf32>
    %76 = arith.addf %71, %75 : vector<16x256xf32>
    %c9_73 = arith.constant 9 : index
    %c0_74 = arith.constant 0 : index
    %77 = vector.load %arg11[%c9_73, %c0_74] : memref<25x256xf32, #tpu.memory_space<vmem>>, vector<16x256xf32>
    %c5 = arith.constant 5 : index
    %c0_75 = arith.constant 0 : index
    %c0_76 = arith.constant 0 : index
    %78 = vector.load %arg6[%c5, %c0_75, %c0_76] : memref<6x256x256xf32, #tpu.memory_space<vmem>>, vector<1x256x256xf32>
    %79 = vector.shape_cast %78 : vector<1x256x256xf32> to vector<256x256xf32>
    %cst_77 = arith.constant dense<0.000000e+00> : vector<16x256xf32>
    %80 = tpu.matmul %77, %79, %cst_77 {dimension_numbers = #tpu.dot_dimension_numbers<[1], [0], [0], [1], [0, 0, 1, 1], [], []>} : vector<16x256xf32>, vector<256x256xf32>, vector<16x256xf32> -> vector<16x256xf32>
    %81 = arith.addf %76, %80 : vector<16x256xf32>
    %c1_78 = arith.constant 1 : index
    %c0_79 = arith.constant 0 : index
    %82 = vector.load %arg7[%c1_78, %c0_79] : memref<2x256xf32, #tpu.memory_space<vmem>>, vector<1x256xf32>
    %83 = vector.broadcast %82 : vector<1x256xf32> to vector<16x256xf32>
    %84 = arith.mulf %81, %83 : vector<16x256xf32>
    %c1_80 = arith.constant 1 : index
    %c0_81 = arith.constant 0 : index
    %85 = vector.load %arg8[%c1_80, %c0_81] : memref<2x256xf32, #tpu.memory_space<vmem>>, vector<1x256xf32>
    %86 = vector.broadcast %85 : vector<1x256xf32> to vector<16x256xf32>
    %87 = arith.addf %84, %86 : vector<16x256xf32>
    %88 = arith.addf %27, %87 : vector<16x256xf32>
    %cst_82 = arith.constant 0.000000e+00 : f32
    %89 = vector.broadcast %cst_82 : f32 to vector<16x256xf32>
    %90 = arith.cmpf ogt, %88, %89 : vector<16x256xf32>
    %91 = math.exp %88 : vector<16x256xf32>
    %cst_83 = arith.constant 1.000000e+00 : f32
    %92 = vector.broadcast %cst_83 : f32 to vector<16x256xf32>
    %93 = arith.subf %91, %92 : vector<16x256xf32>
    %94 = arith.select %90, %88, %93 : vector<16x256xi1>, vector<16x256xf32>
    %c0_84 = arith.constant 0 : index
    %c0_85 = arith.constant 0 : index
    %c0_86 = arith.constant 0 : index
    %95 = vector.load %arg9[%c0_84, %c0_85, %c0_86] : memref<1x16x256xf32, #tpu.memory_space<vmem>>, vector<1x16x256xf32>
    %96 = vector.shape_cast %95 : vector<1x16x256xf32> to vector<16x256xf32>
    %97 = vector.shape_cast %94 : vector<16x256xf32> to vector<1x16x256xf32>
    tpu.vector_store %arg9[%c0_84, %c0_85, %c0_86], %97 {strides = array<i32>} : memref<1x16x256xf32, #tpu.memory_space<vmem>>, vector<1x16x256xf32>,
    return
  }
  func.func @transform_0(%arg0: i32) -> (i32, i32, i32) {
    %c0_i32 = arith.constant 0 : i32
    %c0_i32_0 = arith.constant 0 : i32
    %c0_i32_1 = arith.constant 0 : i32
    return %arg0, %c0_i32, %c0_i32_0 : i32, i32, i32
  }
  func.func @transform_1(%arg0: i32) -> (i32, i32, i32) {
    %c0_i32 = arith.constant 0 : i32
    %c0_i32_0 = arith.constant 0 : i32
    %c0_i32_1 = arith.constant 0 : i32
    %c0_i32_2 = arith.constant 0 : i32
    return %c0_i32, %c0_i32_0, %c0_i32_1 : i32, i32, i32
  }
  func.func @transform_2(%arg0: i32) -> (i32, i32) {
    %c0_i32 = arith.constant 0 : i32
    %c0_i32_0 = arith.constant 0 : i32
    %c0_i32_1 = arith.constant 0 : i32
    return %c0_i32, %c0_i32_0 : i32, i32
  }
  func.func @transform_3(%arg0: i32) -> (i32, i32) {
    %c0_i32 = arith.constant 0 : i32
    %c0_i32_0 = arith.constant 0 : i32
    %c0_i32_1 = arith.constant 0 : i32
    return %c0_i32, %c0_i32_0 : i32, i32
  }
  func.func @transform_4(%arg0: i32) -> (i32, i32) {
    %c0_i32 = arith.constant 0 : i32
    %c0_i32_0 = arith.constant 0 : i32
    %c0_i32_1 = arith.constant 0 : i32
    return %c0_i32, %c0_i32_0 : i32, i32
  }
  func.func @transform_5(%arg0: i32) -> (i32, i32, i32) {
    %c0_i32 = arith.constant 0 : i32
    %c0_i32_0 = arith.constant 0 : i32
    %c0_i32_1 = arith.constant 0 : i32
    %c0_i32_2 = arith.constant 0 : i32
    return %c0_i32, %c0_i32_0, %c0_i32_1 : i32, i32, i32
  }
  func.func @transform_6(%arg0: i32) -> (i32, i32) {
    %c0_i32 = arith.constant 0 : i32
    %c0_i32_0 = arith.constant 0 : i32
    %c0_i32_1 = arith.constant 0 : i32
    return %c0_i32, %c0_i32_0 : i32, i32
  }
  func.func @transform_7(%arg0: i32) -> (i32, i32) {
    %c0_i32 = arith.constant 0 : i32
    %c0_i32_0 = arith.constant 0 : i32
    %c0_i32_1 = arith.constant 0 : i32
    return %c0_i32, %c0_i32_0 : i32, i32
  }
  func.func @transform_8(%arg0: i32) -> (i32, i32, i32) {
    %c0_i32 = arith.constant 0 : i32
    %c0_i32_0 = arith.constant 0 : i32
    %c0_i32_1 = arith.constant 0 : i32
    return %arg0, %c0_i32, %c0_i32_0 : i32, i32, i32
  }
}

</mosaic_0001>

<llo_original>
// kernel: tpu_custom_call.1
$region0: #{tpu_custom_call.1}
  #allocation0 [shape = 'u32[]', space=smem, size = 0x4, offset = 0x4, fixed_abs, tag = 'smem constant byte address 0x4 - core index']
  #allocation1 [shape = 'u32[72,128]{1,0:T(1,128)}', space=vmem, size = 0x9000, scoped, tag = 'internal scratch']
  #allocation2 [shape = 'f32[25,64]{1,0:T(8,128)}', space=vmem, size = 0x4000, scoped, tag = 'scratch operand']
  #allocation3 [shape = 'f32[25,256]{1,0:T(8,128)}', space=vmem, size = 0x8000, scoped, tag = 'scratch operand']
  %s0 = inlined_call_operand.hbm [shape: f32[2,16,64], index: 0, kind: input, shape index: {}]
  %s1 = inlined_call_operand.hbm [shape: f32[3,64,256], index: 1, kind: input, shape index: {}]
  %s2 = inlined_call_operand.hbm [shape: f32[1,256], index: 2, kind: input, shape index: {}]
  %s3 = inlined_call_operand.hbm [shape: f32[1,256], index: 3, kind: input, shape index: {}]
  %s4 = inlined_call_operand.hbm [shape: f32[1,256], index: 4, kind: input, shape index: {}]
  %s5 = inlined_call_operand.hbm [shape: f32[6,256,256], index: 5, kind: input, shape index: {}]
  %s6 = inlined_call_operand.hbm [shape: f32[2,256], index: 6, kind: input, shape index: {}]
  %s7 = inlined_call_operand.hbm [shape: f32[2,256], index: 7, kind: input, shape index: {}]
  %s8 = inlined_call_operand.hbm [shape: f32[2,16,256], index: 8, kind: output, shape index: {}]
  %s9 = sld [smem:[#allocation0]]
  $region97: #{tpu_custom_call.1} parent=0
    _
  %s11 = ssub.s32 1, %s9
  %s12 = scalar_select 0, %s11, %s9
  $region1: #{tpu_custom_call.1} parent=0
    #allocation4 [shape = 'u8[16384]{0}', space=vmem, size = 0x4000, scoped, tag = 'input window, operand 0']
    #allocation5 [shape = 's32[2]{0}', space=sflag, size = 0x8, scoped, tag = 'scoped memory for tpu_custom_call.1']
    #allocation6 [shape = 's32[2]{0}', space=sflag, size = 0x8, scoped, tag = 'scoped memory for tpu_custom_call.1']
    #allocation7 [shape = 'u8[196608]{0}', space=vmem, size = 0x30000, scoped, tag = 'input window, operand 1, single buffered']
    #allocation8 [shape = 's32[1]{0}', space=sflag, size = 0x4, scoped, tag = 'scoped memory for tpu_custom_call.1']
    #allocation9 [shape = 'u8[1024]{0}', space=vmem, size = 0x400, scoped, tag = 'input window, operand 2, single buffered']
    #allocation10 [shape = 'u8[1024]{0}', space=vmem, size = 0x400, scoped, tag = 'input window, operand 3, single buffered']
    #allocation11 [shape = 's32[1]{0}', space=sflag, size = 0x4, scoped, tag = 'scoped memory for tpu_custom_call.1']
    #allocation12 [shape = 'u8[1024]{0}', space=vmem, size = 0x400, scoped, tag = 'input window, operand 4, single buffered']
    #allocation13 [shape = 'u8[1572864]{0}', space=vmem, size = 0x180000, scoped, tag = 'input window, operand 5, single buffered']
    #allocation14 [shape = 's32[1]{0}', space=sflag, size = 0x4, scoped, tag = 'scoped memory for tpu_custom_call.1']
    #allocation15 [shape = 'u8[2048]{0}', space=vmem, size = 0x800, scoped, tag = 'input window, operand 6, single buffered']
    #allocation16 [shape = 'u8[2048]{0}', space=vmem, size = 0x800, scoped, tag = 'input window, operand 7, single buffered']
    #allocation17 [shape = 's32[1]{0}', space=sflag, size = 0x4, scoped, tag = 'scoped memory for tpu_custom_call.1']
    #allocation18 [shape = 'u8[32768]{0}', space=vmem, size = 0x8000, scoped, tag = 'output window, operand 0']
    %13 = vsyncpa [#allocation5], 0
    %s14 = scalar_lea.sflag [#allocation5], 1
    %15 = vsyncpa %s14, 0
    %16 = vsyncpa [#allocation8], 0
    %17 = vsyncpa [#allocation11], 0
    %18 = vsyncpa [#allocation14], 0
    %19 = vsyncpa [#allocation17], 0
    %20 = vsyncpa [#allocation6], 0
    %s21 = scalar_lea.sflag [#allocation6], 1
    %22 = vsyncpa %s21, 0
    loop: start=0, step=1, limit=4
    $region2: #{tpu_custom_call.1} parent=1 // loop_pre_header
      _
    $region3: #{tpu_custom_call.1} parent=1 // loop_header
      %s24 = sphi 0, %s28
      %p25 = scmp.ge.s32.totalorder %s24, 4
      %s34 = sphi 0, %s36
      %s37 = sphi 0, %s34
      %s38 = sphi 0, %s37
      %s54 = sphi 0, %s38
      %s58 = sphi 0, %s58
      %s60 = sphi 0, %s58
      %s61 = sphi 0, %s60
      %s75 = sphi 0, %s61
      %s79 = sphi 0, %s79
      %s81 = sphi 0, %s79
      %s82 = sphi 0, %s81
      %s96 = sphi 0, %s82
      %s100 = sphi 0, %s100
      %s102 = sphi 0, %s100
      %s103 = sphi 0, %s102
      %s117 = sphi 0, %s103
      %s121 = sphi 0, %s121
      %s123 = sphi 0, %s121
      %s124 = sphi 0, %s123
      %s138 = sphi 0, %s124
      %s142 = sphi 0, %s142
      %s144 = sphi 0, %s142
      %s145 = sphi 0, %s144
      %s159 = sphi 0, %s145
      %s163 = sphi 0, %s163
      %s165 = sphi 0, %s163
      %s166 = sphi 0, %s165
      %s180 = sphi 0, %s166
      %s184 = sphi 0, %s184
      %s186 = sphi 0, %s184
      %s187 = sphi 0, %s186
      %s201 = sphi 0, %s187
      %s207 = sphi 0, %s209
      %s210 = sphi 0, %s207
      %s211 = sphi 0, %s210
      %s227 = sphi 0, %s211
    $region4: #{tpu_custom_call.1} parent=1 // loop_header_branch
      %27 = sbr.rel (%p25) target = $region8
    $region5: #{tpu_custom_call.1} parent=1 // loop_body
      %s29 = ssub.s32 %s24, 1
      %s30 = ssub.s32 %s24, 2
      %s31 = sadd.s32 %s24, 1
      %s32 = ssub.s32 %s24, %s31
      %p33 = scmp.eq.s32.totalorder %s32, 0
      %s35 = sadd.s32 %s34, 1
      %s36 = scalar_select %p33, %s34, %s35
      %p39 = pneg %p33
      %p40 = scmp.eq.s32.totalorder %s24, 1
      %p41 = por %p39, %p40
      %p42 = scmp.ne.s32.totalorder %s34, %s37
      %p43 = scmp.eq.s32.totalorder %s24, 0
      %p44 = por %p42, %p43
      %p45 = scmp.ne.s32.totalorder %s34, %s37
      %p46 = scmp.eq.s32.totalorder %s29, 1
      %p47 = por %p45, %p46
      %p48 = scmp.ne.s32.totalorder %s37, %s38
      %p49 = scmp.eq.s32.totalorder %s29, 0
      %p50 = por %p48, %p49
      %p51 = scmp.ne.s32.totalorder %s37, %s38
      %p52 = scmp.eq.s32.totalorder %s30, 1
      %p53 = por %p51, %p52
      %p55 = scmp.ne.s32.totalorder %s38, %s54
      %p56 = scmp.eq.s32.totalorder %s30, 0
      %p57 = por %p55, %p56
      %s59 = sadd.s32 %s58, 1
      %p62 = scmp.eq.s32.totalorder %s24, 1
      %p63 = scmp.ne.s32.totalorder %s58, %s60
      %p64 = scmp.eq.s32.totalorder %s24, 0
      %p65 = por %p63, %p64
      %p66 = scmp.ne.s32.totalorder %s58, %s60
      %p67 = scmp.eq.s32.totalorder %s29, 1
      %p68 = por %p66, %p67
      %p69 = scmp.ne.s32.totalorder %s60, %s61
      %p70 = scmp.eq.s32.totalorder %s29, 0
      %p71 = por %p69, %p70
      %p72 = scmp.ne.s32.totalorder %s60, %s61
      %p73 = scmp.eq.s32.totalorder %s30, 1
      %p74 = por %p72, %p73
      %p76 = scmp.ne.s32.totalorder %s61, %s75
      %p77 = scmp.eq.s32.totalorder %s30, 0
      %p78 = por %p76, %p77
      %s80 = sadd.s32 %s79, 1
      %p83 = scmp.eq.s32.totalorder %s24, 1
      %p84 = scmp.ne.s32.totalorder %s79, %s81
      %p85 = scmp.eq.s32.totalorder %s24, 0
      %p86 = por %p84, %p85
      %p87 = scmp.ne.s32.totalorder %s79, %s81
      %p88 = scmp.eq.s32.totalorder %s29, 1
      %p89 = por %p87, %p88
      %p90 = scmp.ne.s32.totalorder %s81, %s82
      %p91 = scmp.eq.s32.totalorder %s29, 0
      %p92 = por %p90, %p91
      %p93 = scmp.ne.s32.totalorder %s81, %s82
      %p94 = scmp.eq.s32.totalorder %s30, 1
      %p95 = por %p93, %p94
      %p97 = scmp.ne.s32.totalorder %s82, %s96
      %p98 = scmp.eq.s32.totalorder %s30, 0
      %p99 = por %p97, %p98
      %s101 = sadd.s32 %s100, 1
      %p104 = scmp.eq.s32.totalorder %s24, 1
      %p105 = scmp.ne.s32.totalorder %s100, %s102
      %p106 = scmp.eq.s32.totalorder %s24, 0
      %p107 = por %p105, %p106
      %p108 = scmp.ne.s32.totalorder %s100, %s102
      %p109 = scmp.eq.s32.totalorder %s29, 1
      %p110 = por %p108, %p109
      %p111 = scmp.ne.s32.totalorder %s102, %s103
      %p112 = scmp.eq.s32.totalorder %s29, 0
      %p113 = por %p111, %p112
      %p114 = scmp.ne.s32.totalorder %s102, %s103
      %p115 = scmp.eq.s32.totalorder %s30, 1
      %p116 = por %p114, %p115
      %p118 = scmp.ne.s32.totalorder %s103, %s117
      %p119 = scmp.eq.s32.totalorder %s30, 0
      %p120 = por %p118, %p119
      %s122 = sadd.s32 %s121, 1
      %p125 = scmp.eq.s32.totalorder %s24, 1
      %p126 = scmp.ne.s32.totalorder %s121, %s123
      %p127 = scmp.eq.s32.totalorder %s24, 0
      %p128 = por %p126, %p127
      %p129 = scmp.ne.s32.totalorder %s121, %s123
      %p130 = scmp.eq.s32.totalorder %s29, 1
      %p131 = por %p129, %p130
      %p132 = scmp.ne.s32.totalorder %s123, %s124
      %p133 = scmp.eq.s32.totalorder %s29, 0
      %p134 = por %p132, %p133
      %p135 = scmp.ne.s32.totalorder %s123, %s124
      %p136 = scmp.eq.s32.totalorder %s30, 1
      %p137 = por %p135, %p136
      %p139 = scmp.ne.s32.totalorder %s124, %s138
      %p140 = scmp.eq.s32.totalorder %s30, 0
      %p141 = por %p139, %p140
      %s143 = sadd.s32 %s142, 1
      %p146 = scmp.eq.s32.totalorder %s24, 1
      %p147 = scmp.ne.s32.totalorder %s142, %s144
      %p148 = scmp.eq.s32.totalorder %s24, 0
      %p149 = por %p147, %p148
      %p150 = scmp.ne.s32.totalorder %s142, %s144
      %p151 = scmp.eq.s32.totalorder %s29, 1
      %p152 = por %p150, %p151
      %p153 = scmp.ne.s32.totalorder %s144, %s145
      %p154 = scmp.eq.s32.totalorder %s29, 0
      %p155 = por %p153, %p154
      %p156 = scmp.ne.s32.totalorder %s144, %s145
      %p157 = scmp.eq.s32.totalorder %s30, 1
      %p158 = por %p156, %p157
      %p160 = scmp.ne.s32.totalorder %s145, %s159
      %p161 = scmp.eq.s32.totalorder %s30, 0
      %p162 = por %p160, %p161
      %s164 = sadd.s32 %s163, 1
      %p167 = scmp.eq.s32.totalorder %s24, 1
      %p168 = scmp.ne.s32.totalorder %s163, %s165
      %p169 = scmp.eq.s32.totalorder %s24, 0
      %p170 = por %p168, %p169
      %p171 = scmp.ne.s32.totalorder %s163, %s165
      %p172 = scmp.eq.s32.totalorder %s29, 1
      %p173 = por %p171, %p172
      %p174 = scmp.ne.s32.totalorder %s165, %s166
      %p175 = scmp.eq.s32.totalorder %s29, 0
      %p176 = por %p174, %p175
      %p177 = scmp.ne.s32.totalorder %s165, %s166
      %p178 = scmp.eq.s32.totalorder %s30, 1
      %p179 = por %p177, %p178
      %p181 = scmp.ne.s32.totalorder %s166, %s180
      %p182 = scmp.eq.s32.totalorder %s30, 0
      %p183 = por %p181, %p182
      %s185 = sadd.s32 %s184, 1
      %p188 = scmp.eq.s32.totalorder %s24, 1
      %p189 = scmp.ne.s32.totalorder %s184, %s186
      %p190 = scmp.eq.s32.totalorder %s24, 0
      %p191 = por %p189, %p190
      %p192 = scmp.ne.s32.totalorder %s184, %s186
      %p193 = scmp.eq.s32.totalorder %s29, 1
      %p194 = por %p192, %p193
      %p195 = scmp.ne.s32.totalorder %s186, %s187
      %p196 = scmp.eq.s32.totalorder %s29, 0
      %p197 = por %p195, %p196
      %p198 = scmp.ne.s32.totalorder %s186, %s187
      %p199 = scmp.eq.s32.totalorder %s30, 1
      %p200 = por %p198, %p199
      %p202 = scmp.ne.s32.totalorder %s187, %s201
      %p203 = scmp.eq.s32.totalorder %s30, 0
      %p204 = por %p202, %p203
      %s205 = ssub.s32 %s24, %s31
      %p206 = scmp.eq.s32.totalorder %s205, 0
      %s208 = sadd.s32 %s207, 1
      %s209 = scalar_select %p206, %s207, %s208
      %p212 = pneg %p206
      %p213 = scmp.eq.s32.totalorder %s24, 1
      %p214 = por %p212, %p213
      %p215 = scmp.ne.s32.totalorder %s207, %s210
      %p216 = scmp.eq.s32.totalorder %s24, 0
      %p217 = por %p215, %p216
      %p218 = scmp.ne.s32.totalorder %s207, %s210
      %p219 = scmp.eq.s32.totalorder %s29, 1
      %p220 = por %p218, %p219
      %p221 = scmp.ne.s32.totalorder %s210, %s211
      %p222 = scmp.eq.s32.totalorder %s29, 0
      %p223 = por %p221, %p222
      %p224 = scmp.ne.s32.totalorder %s210, %s211
      %p225 = scmp.eq.s32.totalorder %s30, 1
      %p226 = por %p224, %p225
      %p228 = scmp.ne.s32.totalorder %s211, %s227
      %p229 = scmp.eq.s32.totalorder %s30, 0
      %p230 = por %p228, %p229
      %p231 = scmp.le.s32.totalorder 1, %s24
      %p232 = scmp.lt.s32.totalorder %s24, 3
      %p233 = pnand %p231, %p232
      %p234 = pneg %p233
      // Predicated region
      $region9: #{tpu_custom_call.1} parent=5 // pred_check
        _
      $region10: #{tpu_custom_call.1} parent=5 // pred_check_branch
        %236 = sbr.rel (%p233) target = $region12
      $region11: #{tpu_custom_call.1} parent=5 // pred_region
        %s237 = ssub.s32 %s24, 1
        // Predicated region
        $region13: #{tpu_custom_call.1} parent=11 // pred_check
          %p238 = pneg %p71
        $region14: #{tpu_custom_call.1} parent=11 // pred_check_branch
          %240 = sbr.rel (%p238) target = $region16
        $region15: #{tpu_custom_call.1} parent=11 // pred_region
          %242 = vsyncadd [#allocation8], 0
          %s243 = sshll.u32 %s1, 4
          %s244 = int_to_ptr.hbm [resolvable:$true] %s243
          %s245 = sshll.u32 [#allocation7], 4
          %s246 = int_to_ptr.vmem [resolvable:$true] %s245
          %251 = dma.hbm_to_vmem [thread:$0]  %s244, 6144, %s246, [#allocation8], 256, 256, 16
        $region16: #{tpu_custom_call.1} parent=11 // pred_fallthru
          _
        // Predicated region
        $region17: #{tpu_custom_call.1} parent=11 // pred_check
          %p252 = pneg %p92
        $region18: #{tpu_custom_call.1} parent=11 // pred_check_branch
          %254 = sbr.rel (%p252) target = $region20
        $region19: #{tpu_custom_call.1} parent=11 // pred_region
          %256 = vsyncadd [#allocation8], 0
          %s258 = sshll.u32 %s2, 4
          %s259 = int_to_ptr.hbm [resolvable:$true] %s258
          %s260 = sshll.u32 [#allocation9], 4
          %s261 = int_to_ptr.vmem [resolvable:$true] %s260
          %263 = dma.hbm_to_vmem [thread:$0]  %s259, 32, %s261, [#allocation8]
        $region20: #{tpu_custom_call.1} parent=11 // pred_fallthru
          _
        // Predicated region
        $region21: #{tpu_custom_call.1} parent=11 // pred_check
          %p264 = pneg %p113
        $region22: #{tpu_custom_call.1} parent=11 // pred_check_branch
          %266 = sbr.rel (%p264) target = $region24
        $region23: #{tpu_custom_call.1} parent=11 // pred_region
          %268 = vsyncadd [#allocation11], 0
          %s270 = sshll.u32 %s3, 4
          %s271 = int_to_ptr.hbm [resolvable:$true] %s270
          %s272 = sshll.u32 [#allocation10], 4
          %s273 = int_to_ptr.vmem [resolvable:$true] %s272
          %275 = dma.hbm_to_vmem [thread:$0]  %s271, 32, %s273, [#allocation11]
        $region24: #{tpu_custom_call.1} parent=11 // pred_fallthru
          _
        // Predicated region
        $region25: #{tpu_custom_call.1} parent=11 // pred_check
          %p276 = pneg %p134
        $region26: #{tpu_custom_call.1} parent=11 // pred_check_branch
          %278 = sbr.rel (%p276) target = $region28
        $region27: #{tpu_custom_call.1} parent=11 // pred_region
          %280 = vsyncadd [#allocation11], 0
          %s282 = sshll.u32 %s4, 4
          %s283 = int_to_ptr.hbm [resolvable:$true] %s282
          %s284 = sshll.u32 [#allocation12], 4
          %s285 = int_to_ptr.vmem [resolvable:$true] %s284
          %287 = dma.hbm_to_vmem [thread:$0]  %s283, 32, %s285, [#allocation11]
        $region28: #{tpu_custom_call.1} parent=11 // pred_fallthru
          _
        // Predicated region
        $region29: #{tpu_custom_call.1} parent=11 // pred_check
          %p288 = pneg %p155
        $region30: #{tpu_custom_call.1} parent=11 // pred_check_branch
          %290 = sbr.rel (%p288) target = $region32
        $region31: #{tpu_custom_call.1} parent=11 // pred_region
          %292 = vsyncadd [#allocation14], 0
          %s293 = sshll.u32 %s5, 4
          %s294 = int_to_ptr.hbm [resolvable:$true] %s293
          %s295 = sshll.u32 [#allocation13], 4
          %s296 = int_to_ptr.vmem [resolvable:$true] %s295
          %301 = dma.hbm_to_vmem [thread:$0]  %s294, 49152, %s296, [#allocation14], 256, 256, 16
        $region32: #{tpu_custom_call.1} parent=11 // pred_fallthru
          _
        // Predicated region
        $region33: #{tpu_custom_call.1} parent=11 // pred_check
          %p302 = pneg %p176
        $region34: #{tpu_custom_call.1} parent=11 // pred_check_branch
          %304 = sbr.rel (%p302) target = $region36
        $region35: #{tpu_custom_call.1} parent=11 // pred_region
          %306 = vsyncadd [#allocation14], 0
          %s308 = sshll.u32 %s6, 4
          %s309 = int_to_ptr.hbm [resolvable:$true] %s308
          %s310 = sshll.u32 [#allocation15], 4
          %s311 = int_to_ptr.vmem [resolvable:$true] %s310
          %313 = dma.hbm_to_vmem [thread:$0]  %s309, 64, %s311, [#allocation14]
        $region36: #{tpu_custom_call.1} parent=11 // pred_fallthru
          _
        // Predicated region
        $region37: #{tpu_custom_call.1} parent=11 // pred_check
          %p314 = pneg %p197
        $region38: #{tpu_custom_call.1} parent=11 // pred_check_branch
          %316 = sbr.rel (%p314) target = $region40
        $region39: #{tpu_custom_call.1} parent=11 // pred_region
          %318 = vsyncadd [#allocation17], 0
          %s320 = sshll.u32 %s7, 4
          %s321 = int_to_ptr.hbm [resolvable:$true] %s320
          %s322 = sshll.u32 [#allocation16], 4
          %s323 = int_to_ptr.vmem [resolvable:$true] %s322
          %325 = dma.hbm_to_vmem [thread:$0]  %s321, 64, %s323, [#allocation17]
        $region40: #{tpu_custom_call.1} parent=11 // pred_fallthru
          _
      $region12: #{tpu_custom_call.1} parent=5 // pred_fallthru
        _
      %p326 = scmp.lt.s32.totalorder %s24, 2
      // Predicated region
      $region41: #{tpu_custom_call.1} parent=5 // pred_check
        %p327 = pneg %p326
      $region42: #{tpu_custom_call.1} parent=5 // pred_check_branch
        %329 = sbr.rel (%p327) target = $region44
      $region43: #{tpu_custom_call.1} parent=5 // pred_region
        // Predicated region
        $region45: #{tpu_custom_call.1} parent=43 // pred_check
          %p330 = pneg %p44
        $region46: #{tpu_custom_call.1} parent=43 // pred_check_branch
          %332 = sbr.rel (%p330) target = $region48
        $region47: #{tpu_custom_call.1} parent=43 // pred_region
          %s333 = sand.u32 %s34, 1
          %s334 = scalar_lea.sflag [#allocation5], %s333
          %s335 = sand.u32 %s34, 1
          %s336 = smul.addr %s335, 16
          %s337 = scalar_lea.vmem [#allocation4], %s336
          %339 = vsyncadd %s334, 0
          %s340 = smul.addr %s24, 2
          %s341 = smul.addr %s340, 8
          %s342 = scalar_lea.hbm %s0, %s341
          %s343 = sshll.u32 %s342, 4
          %s344 = int_to_ptr.hbm [resolvable:$true] %s343
          %s345 = sshll.u32 %s337, 4
          %s346 = int_to_ptr.vmem [resolvable:$true] %s345
          %351 = dma.hbm_to_vmem [thread:$0]  %s344, 256, %s346, %s334, 128, 128, 8
        $region48: #{tpu_custom_call.1} parent=43 // pred_fallthru
          _
      $region44: #{tpu_custom_call.1} parent=5 // pred_fallthru
        _
      %p352 = scmp.le.s32.totalorder 1, %s24
      %p353 = scmp.lt.s32.totalorder %s24, 3
      %p354 = pnand %p352, %p353
      %p355 = pneg %p354
      // Predicated region
      $region49: #{tpu_custom_call.1} parent=5 // pred_check
        _
      $region50: #{tpu_custom_call.1} parent=5 // pred_check_branch
        %357 = sbr.rel (%p354) target = $region52
      $region51: #{tpu_custom_call.1} parent=5 // pred_region
        %s358 = ssub.s32 %s24, 1
        %s359 = sand.u32 %s37, 1
        %s360 = scalar_lea.sflag [#allocation5], %s359
        %s361 = sand.u32 %s37, 1
        %s362 = smul.addr %s361, 16
        %s363 = scalar_lea.vmem [#allocation4], %s362
        // Predicated region
        $region53: #{tpu_custom_call.1} parent=51 // pred_check
          %p364 = pneg %p50
        $region54: #{tpu_custom_call.1} parent=51 // pred_check_branch
          %366 = sbr.rel (%p364) target = $region56
        $region55: #{tpu_custom_call.1} parent=51 // pred_region
          %368 = dma.done %s360, 256
        $region56: #{tpu_custom_call.1} parent=51 // pred_fallthru
          _
        // Predicated region
        $region57: #{tpu_custom_call.1} parent=51 // pred_check
          %p369 = pneg %p71
        $region58: #{tpu_custom_call.1} parent=51 // pred_check_branch
          %371 = sbr.rel (%p369) target = $region60
        $region59: #{tpu_custom_call.1} parent=51 // pred_region
          %373 = dma.done [#allocation8], 6144
        $region60: #{tpu_custom_call.1} parent=51 // pred_fallthru
          _
        // Predicated region
        $region61: #{tpu_custom_call.1} parent=51 // pred_check
          %p374 = pneg %p92
        $region62: #{tpu_custom_call.1} parent=51 // pred_check_branch
          %376 = sbr.rel (%p374) target = $region64
        $region63: #{tpu_custom_call.1} parent=51 // pred_region
          %378 = dma.done [#allocation8], 32
        $region64: #{tpu_custom_call.1} parent=51 // pred_fallthru
          _
        // Predicated region
        $region65: #{tpu_custom_call.1} parent=51 // pred_check
          %p379 = pneg %p113
        $region66: #{tpu_custom_call.1} parent=51 // pred_check_branch
          %381 = sbr.rel (%p379) target = $region68
        $region67: #{tpu_custom_call.1} parent=51 // pred_region
          %383 = dma.done [#allocation11], 32
        $region68: #{tpu_custom_call.1} parent=51 // pred_fallthru
          _
        // Predicated region
        $region69: #{tpu_custom_call.1} parent=51 // pred_check
          %p384 = pneg %p134
        $region70: #{tpu_custom_call.1} parent=51 // pred_check_branch
          %386 = sbr.rel (%p384) target = $region72
        $region71: #{tpu_custom_call.1} parent=51 // pred_region
          %388 = dma.done [#allocation11], 32
        $region72: #{tpu_custom_call.1} parent=51 // pred_fallthru
          _
        // Predicated region
        $region73: #{tpu_custom_call.1} parent=51 // pred_check
          %p389 = pneg %p155
        $region74: #{tpu_custom_call.1} parent=51 // pred_check_branch
          %391 = sbr.rel (%p389) target = $region76
        $region75: #{tpu_custom_call.1} parent=51 // pred_region
          %393 = dma.done [#allocation14], 49152
        $region76: #{tpu_custom_call.1} parent=51 // pred_fallthru
          _
        // Predicated region
        $region77: #{tpu_custom_call.1} parent=51 // pred_check
          %p394 = pneg %p176
        $region78: #{tpu_custom_call.1} parent=51 // pred_check_branch
          %396 = sbr.rel (%p394) target = $region80
        $region79: #{tpu_custom_call.1} parent=51 // pred_region
          %398 = dma.done [#allocation14], 64
        $region80: #{tpu_custom_call.1} parent=51 // pred_fallthru
          _
        // Predicated region
        $region81: #{tpu_custom_call.1} parent=51 // pred_check
          %p399 = pneg %p197
        $region82: #{tpu_custom_call.1} parent=51 // pred_check_branch
          %401 = sbr.rel (%p399) target = $region84
        $region83: #{tpu_custom_call.1} parent=51 // pred_region
          %403 = dma.done [#allocation17], 64
        $region84: #{tpu_custom_call.1} parent=51 // pred_fallthru
          _
        %s404 = sand.u32 %s37, 1
        %s405 = scalar_lea.sflag [#allocation5], %s404
        %s406 = sand.u32 %s37, 1
        %s407 = smul.addr %s406, 16
        %s408 = scalar_lea.vmem [#allocation4], %s407
        %p409 = pneg %p50
        %p410 = pneg %p47
        %p411 = pneg %p71
        %p412 = pneg %p68
        %p413 = pneg %p92
        %p414 = pneg %p89
        %p415 = pneg %p113
        %p416 = pneg %p110
        %p417 = pneg %p134
        %p418 = pneg %p131
        %p419 = pneg %p155
        %p420 = pneg %p152
        %p421 = pneg %p176
        %p422 = pneg %p173
        %p423 = pneg %p197
        %p424 = pneg %p194
        %p425 = pneg %p223
        %p426 = pneg %p220
        %s427 = sand.u32 %s210, 1
        %s428 = scalar_lea.sflag [#allocation6], %s427
        %s429 = sand.u32 %s210, 1
        %s430 = smul.addr %s429, 32
        %s431 = scalar_lea.vmem [#allocation18], %s430
        %vm432 = vcmask 523264
        %433 = vst.msk [vmem:[#allocation2] sm:$0xff] %vm432, 0.0
        %vm434 = vcmask 516096
        %435 = vst.msk [vmem:[#allocation2 + $0x18] sm:$0x1] %vm434, 0.0
        %436 = vst [vmem:[#allocation3] sm:$0xff] 0.0
        %437 = vst [vmem:[#allocation3 + $0x8] sm:$0xff] 0.0
        %v438 = vlaneseq
        %vm439 = vcmp.ge.s32.totalorder %v438, 0
        %vm440 = vcmp.lt.s32.totalorder %v438, 256
        %vm441 = vmand %vm439, %vm440
        %s442 = scalar_lea.vmem [#allocation3], 48
        %443 = vst.msk [vmem:[%s442] ss:$8 sm:$0x3] %vm441, 0.0
        %444 = vst.msk [vmem:[%s442] ss:$8 sm:$0x0] %vm441, 0.0
        %v445 = vld [vmem:[%s363] sm:$0xff]
        %v446 = vld [vmem:[%s363 + $0x8] sm:$0xff]
        %447 = vst.msk [vmem:[#allocation2 + $0x8] sm:$0xff] %vm432, %v445
        %448 = vst.msk [vmem:[#allocation2 + $0x10] sm:$0xff] %vm432, %v446
        %v449 = vld [vmem:[#allocation2 + $0x7] sm:$0xff]
        %v450 = vld [vmem:[#allocation2 + $0xf] sm:$0xff]
        %v451 = vld [vmem:[#allocation7] sm:$0xff]
        %v452 = vld [vmem:[#allocation7 + $0x8] sm:$0xff]
        %v453 = vld [vmem:[#allocation7 + $0x10] sm:$0xff]
        %v454 = vld [vmem:[#allocation7 + $0x18] sm:$0xff]
        %v455 = vld [vmem:[#allocation7 + $0x20] sm:$0xff]
        %v456 = vld [vmem:[#allocation7 + $0x28] sm:$0xff]
        %v457 = vld [vmem:[#allocation7 + $0x30] sm:$0xff]
        %v458 = vld [vmem:[#allocation7 + $0x38] sm:$0xff]
        %v459 = vld [vmem:[#allocation7 + $0x40] sm:$0xff]
        %v460 = vld [vmem:[#allocation7 + $0x48] sm:$0xff]
        %v461 = vld [vmem:[#allocation7 + $0x50] sm:$0xff]
        %v462 = vld [vmem:[#allocation7 + $0x58] sm:$0xff]
        %v463 = vld [vmem:[#allocation7 + $0x60] sm:$0xff]
        %v464 = vld [vmem:[#allocation7 + $0x68] sm:$0xff]
        %v465 = vld [vmem:[#allocation7 + $0x70] sm:$0xff]
        %v466 = vld [vmem:[#allocation7 + $0x78] sm:$0xff]
        %v467 = vld [vmem:[#allocation2 + $0x8] sm:$0xff]
        %v468 = vld [vmem:[#allocation2 + $0x10] sm:$0xff]
        %s469 = scalar_lea.vmem [#allocation7], 128
        %v470 = vld [vmem:[%s469] sm:$0xff]
        %v471 = vld [vmem:[%s469 + $0x8] sm:$0xff]
        %v472 = vld [vmem:[%s469 + $0x10] sm:$0xff]
        %v473 = vld [vmem:[%s469 + $0x18] sm:$0xff]
        %v474 = vld [vmem:[%s469 + $0x20] sm:$0xff]
        %v475 = vld [vmem:[%s469 + $0x28] sm:$0xff]
        %v476 = vld [vmem:[%s469 + $0x30] sm:$0xff]
        %v477 = vld [vmem:[%s469 + $0x38] sm:$0xff]
        %v478 = vld [vmem:[%s469 + $0x40] sm:$0xff]
        %v479 = vld [vmem:[%s469 + $0x48] sm:$0xff]
        %v480 = vld [vmem:[%s469 + $0x50] sm:$0xff]
        %v481 = vld [vmem:[%s469 + $0x58] sm:$0xff]
        %v482 = vld [vmem:[%s469 + $0x60] sm:$0xff]
        %v483 = vld [vmem:[%s469 + $0x68] sm:$0xff]
        %v484 = vld [vmem:[%s469 + $0x70] sm:$0xff]
        %v485 = vld [vmem:[%s469 + $0x78] sm:$0xff]
        %v487 = vsel %vm432, %v467, 0
        %v490 = vsel %vm432, %v468, 0
        %492 = vmatpush.msra.mxu0 0.0
        %493 = vmatpush.msra.mxu0 0.0
        %494 = vmatpush.msra.mxu0 0.0
        %495 = vmatpush.msra.mxu0 0.0
        %496 = vmatpush.msra.mxu0 0.0
        %497 = vmatpush.msra.mxu0 0.0
        %498 = vmatpush.msra.mxu0 0.0
        %499 = vmatpush.msra.mxu0 0.0
        %500 = vmatpush.msra.mxu0 %v484
        %501 = vmatpush.msra.mxu0 %v482
        %502 = vmatpush.msra.mxu0 %v480
        %503 = vmatpush.msra.mxu0 %v478
        %504 = vmatpush.msra.mxu0 %v476
        %505 = vmatpush.msra.mxu0 %v474
        %506 = vmatpush.msra.mxu0 %v472
        %507 = vmatpush.msra.mxu0 %v470
        %508 = vmatmul.f32.gmra.mxu0 %v487
        %v509 = vpop.f32.mrf.mxu0
        %v510 = vadd.f32 0.0, %v509
        %511 = vmatmul.f32.gmra.mxu0 %v490
        %v512 = vpop.f32.mrf.mxu0
        %v513 = vadd.f32 0.0, %v512
        %514 = vdwg.mxu0
        %515 = vmatpush.msra.mxu0 0.0
        %516 = vmatpush.msra.mxu0 0.0
        %517 = vmatpush.msra.mxu0 0.0
        %518 = vmatpush.msra.mxu0 0.0
        %519 = vmatpush.msra.mxu0 0.0
        %520 = vmatpush.msra.mxu0 0.0
        %521 = vmatpush.msra.mxu0 0.0
        %522 = vmatpush.msra.mxu0 0.0
        %523 = vmatpush.msra.mxu0 %v485
        %524 = vmatpush.msra.mxu0 %v483
        %525 = vmatpush.msra.mxu0 %v481
        %526 = vmatpush.msra.mxu0 %v479
        %527 = vmatpush.msra.mxu0 %v477
        %528 = vmatpush.msra.mxu0 %v475
        %529 = vmatpush.msra.mxu0 %v473
        %530 = vmatpush.msra.mxu0 %v471
        %531 = vmatmul.f32.gmra.mxu0 %v487
        %v532 = vpop.f32.mrf.mxu0
        %v533 = vadd.f32 0.0, %v532
        %534 = vmatmul.f32.gmra.mxu0 %v490
        %v535 = vpop.f32.mrf.mxu0
        %v536 = vadd.f32 0.0, %v535
        %537 = vdwg.mxu0
        %v539 = vsel %vm432, %v449, 0
        %v542 = vsel %vm432, %v450, 0
        %544 = vmatpush.msra.mxu0 0.0
        %545 = vmatpush.msra.mxu0 0.0
        %546 = vmatpush.msra.mxu0 0.0
        %547 = vmatpush.msra.mxu0 0.0
        %548 = vmatpush.msra.mxu0 0.0
        %549 = vmatpush.msra.mxu0 0.0
        %550 = vmatpush.msra.mxu0 0.0
        %551 = vmatpush.msra.mxu0 0.0
        %552 = vmatpush.msra.mxu0 %v465
        %553 = vmatpush.msra.mxu0 %v463
        %554 = vmatpush.msra.mxu0 %v461
        %555 = vmatpush.msra.mxu0 %v459
        %556 = vmatpush.msra.mxu0 %v457
        %557 = vmatpush.msra.mxu0 %v455
        %558 = vmatpush.msra.mxu0 %v453
        %559 = vmatpush.msra.mxu0 %v451
        %560 = vmatmul.f32.gmra.mxu0 %v539
        %v561 = vpop.f32.mrf.mxu0
        %v562 = vadd.f32 %v510, %v561
        %563 = vmatmul.f32.gmra.mxu0 %v542
        %v564 = vpop.f32.mrf.mxu0
        %v565 = vadd.f32 %v513, %v564
        %566 = vdwg.mxu0
        %567 = vmatpush.msra.mxu0 0.0
        %568 = vmatpush.msra.mxu0 0.0
        %569 = vmatpush.msra.mxu0 0.0
        %570 = vmatpush.msra.mxu0 0.0
        %571 = vmatpush.msra.mxu0 0.0
        %572 = vmatpush.msra.mxu0 0.0
        %573 = vmatpush.msra.mxu0 0.0
        %574 = vmatpush.msra.mxu0 0.0
        %575 = vmatpush.msra.mxu0 %v466
        %576 = vmatpush.msra.mxu0 %v464
        %577 = vmatpush.msra.mxu0 %v462
        %578 = vmatpush.msra.mxu0 %v460
        %579 = vmatpush.msra.mxu0 %v458
        %580 = vmatpush.msra.mxu0 %v456
        %581 = vmatpush.msra.mxu0 %v454
        %582 = vmatpush.msra.mxu0 %v452
        %583 = vmatmul.f32.gmra.mxu0 %v539
        %v584 = vpop.f32.mrf.mxu0
        %v585 = vadd.f32 %v533, %v584
        %586 = vmatmul.f32.gmra.mxu0 %v542
        %v587 = vpop.f32.mrf.mxu0
        %v588 = vadd.f32 %v536, %v587
        %589 = vdwg.mxu0
        %v590 = vld [vmem:[#allocation2 + $0x9] sm:$0xff]
        %v591 = vld [vmem:[#allocation2 + $0x11] sm:$0xff]
        %s592 = scalar_lea.vmem [#allocation7], 256
        %v593 = vld [vmem:[%s592] sm:$0xff]
        %v594 = vld [vmem:[%s592 + $0x8] sm:$0xff]
        %v595 = vld [vmem:[%s592 + $0x10] sm:$0xff]
        %v596 = vld [vmem:[%s592 + $0x18] sm:$0xff]
        %v597 = vld [vmem:[%s592 + $0x20] sm:$0xff]
        %v598 = vld [vmem:[%s592 + $0x28] sm:$0xff]
        %v599 = vld [vmem:[%s592 + $0x30] sm:$0xff]
        %v600 = vld [vmem:[%s592 + $0x38] sm:$0xff]
        %v601 = vld [vmem:[%s592 + $0x40] sm:$0xff]
        %v602 = vld [vmem:[%s592 + $0x48] sm:$0xff]
        %v603 = vld [vmem:[%s592 + $0x50] sm:$0xff]
        %v604 = vld [vmem:[%s592 + $0x58] sm:$0xff]
        %v605 = vld [vmem:[%s592 + $0x60] sm:$0xff]
        %v606 = vld [vmem:[%s592 + $0x68] sm:$0xff]
        %v607 = vld [vmem:[%s592 + $0x70] sm:$0xff]
        %v608 = vld [vmem:[%s592 + $0x78] sm:$0xff]
        %v610 = vsel %vm432, %v590, 0
        %v613 = vsel %vm432, %v591, 0
        %615 = vmatpush.msra.mxu0 0.0
        %616 = vmatpush.msra.mxu0 0.0
        %617 = vmatpush.msra.mxu0 0.0
        %618 = vmatpush.msra.mxu0 0.0
        %619 = vmatpush.msra.mxu0 0.0
        %620 = vmatpush.msra.mxu0 0.0
        %621 = vmatpush.msra.mxu0 0.0
        %622 = vmatpush.msra.mxu0 0.0
        %623 = vmatpush.msra.mxu0 %v607
        %624 = vmatpush.msra.mxu0 %v605
        %625 = vmatpush.msra.mxu0 %v603
        %626 = vmatpush.msra.mxu0 %v601
        %627 = vmatpush.msra.mxu0 %v599
        %628 = vmatpush.msra.mxu0 %v597
        %629 = vmatpush.msra.mxu0 %v595
        %630 = vmatpush.msra.mxu0 %v593
        %631 = vmatmul.f32.gmra.mxu0 %v610
        %v632 = vpop.f32.mrf.mxu0
        %v633 = vadd.f32 0.0, %v632
        %634 = vmatmul.f32.gmra.mxu0 %v613
        %v635 = vpop.f32.mrf.mxu0
        %v636 = vadd.f32 0.0, %v635
        %637 = vdwg.mxu0
        %638 = vmatpush.msra.mxu0 0.0
        %639 = vmatpush.msra.mxu0 0.0
        %640 = vmatpush.msra.mxu0 0.0
        %641 = vmatpush.msra.mxu0 0.0
        %642 = vmatpush.msra.mxu0 0.0
        %643 = vmatpush.msra.mxu0 0.0
        %644 = vmatpush.msra.mxu0 0.0
        %645 = vmatpush.msra.mxu0 0.0
        %646 = vmatpush.msra.mxu0 %v608
        %647 = vmatpush.msra.mxu0 %v606
        %648 = vmatpush.msra.mxu0 %v604
        %649 = vmatpush.msra.mxu0 %v602
        %650 = vmatpush.msra.mxu0 %v600
        %651 = vmatpush.msra.mxu0 %v598
        %652 = vmatpush.msra.mxu0 %v596
        %653 = vmatpush.msra.mxu0 %v594
        %654 = vmatmul.f32.gmra.mxu0 %v610
        %v655 = vpop.f32.mrf.mxu0
        %v656 = vadd.f32 0.0, %v655
        %657 = vmatmul.f32.gmra.mxu0 %v613
        %v658 = vpop.f32.mrf.mxu0
        %v659 = vadd.f32 0.0, %v658
        %660 = vdwg.mxu0
        %v661 = vadd.f32 %v562, %v633
        %v662 = vadd.f32 %v585, %v656
        %v663 = vadd.f32 %v565, %v636
        %v664 = vadd.f32 %v588, %v659
        %v665 = vld [vmem:[#allocation9] sm:$0x3]
        %v667 = vperm.slane %v665, 0
        %v668 = vperm.slane %v665, 1
        %v671 = vadd.f32 %v661, %v667
        %v672 = vadd.f32 %v662, %v668
        %v673 = vadd.f32 %v663, %v667
        %v674 = vadd.f32 %v664, %v668
        %v675 = vld [vmem:[#allocation10] sm:$0x3]
        %v677 = vperm.slane %v675, 0
        %v678 = vperm.slane %v675, 1
        %v681 = vmul.f32 %v671, %v677
        %v682 = vmul.f32 %v672, %v678
        %v683 = vmul.f32 %v673, %v677
        %v684 = vmul.f32 %v674, %v678
        %v685 = vld [vmem:[#allocation12] sm:$0x3]
        %v687 = vperm.slane %v685, 0
        %v688 = vperm.slane %v685, 1
        %v691 = vadd.f32 %v681, %v687
        %v692 = vadd.f32 %v682, %v688
        %v693 = vadd.f32 %v683, %v687
        %v694 = vadd.f32 %v684, %v688
        %vm695 = vcmp.gt.f32.partialorder %v691, 0.0
        %vm696 = vcmp.gt.f32.partialorder %v692, 0.0
        %vm697 = vcmp.gt.f32.partialorder %v693, 0.0
        %vm698 = vcmp.gt.f32.partialorder %v694, 0.0
        %v699 = vmul.f32 %v691, 1.442695
        %v700 = vpow.pop %v699
        %v701 = vmul.f32 %v692, 1.442695
        %v702 = vpow.pop %v701
        %v703 = vmul.f32 %v693, 1.442695
        %v704 = vpow.pop %v703
        %v705 = vmul.f32 %v694, 1.442695
        %v706 = vpow.pop %v705
        %v707 = vsub.f32 %v700, 1.0
        %v708 = vsub.f32 %v702, 1.0
        %v709 = vsub.f32 %v704, 1.0
        %v710 = vsub.f32 %v706, 1.0
        %v711 = vsel %vm695, %v691, %v707
        %v712 = vsel %vm696, %v692, %v708
        %v713 = vsel %vm697, %v693, %v709
        %v714 = vsel %vm698, %v694, %v710
        %715 = vst [vmem:[#allocation3 + $0x10] sm:$0xff] %v711
        %716 = vst [vmem:[#allocation3 + $0x18] sm:$0xff] %v712
        %717 = vst [vmem:[#allocation3 + $0x20] sm:$0xff] %v713
        %718 = vst [vmem:[#allocation3 + $0x28] sm:$0xff] %v714
        %v719 = vld [vmem:[#allocation3] sm:$0x80]
        %v720 = vld [vmem:[#allocation3 + $0x8] sm:$0x80]
        %v721 = vld [vmem:[#allocation3 + $0x10] sm:$0xff]
        %v722 = vld [vmem:[#allocation3 + $0x18] sm:$0xff]
        %v723 = vld [vmem:[#allocation3 + $0x20] sm:$0x7f]
        %v724 = vld [vmem:[#allocation3 + $0x28] sm:$0x7f]
        %v725 = vld [vmem:[#allocation13] sm:$0xff]
        %v726 = vld [vmem:[#allocation13 + $0x8] sm:$0xff]
        %v727 = vld [vmem:[#allocation13 + $0x10] sm:$0xff]
        %v728 = vld [vmem:[#allocation13 + $0x18] sm:$0xff]
        %v729 = vld [vmem:[#allocation13 + $0x20] sm:$0xff]
        %v730 = vld [vmem:[#allocation13 + $0x28] sm:$0xff]
        %v731 = vld [vmem:[#allocation13 + $0x30] sm:$0xff]
        %v732 = vld [vmem:[#allocation13 + $0x38] sm:$0xff]
        %v733 = vld [vmem:[#allocation13 + $0x40] sm:$0xff]
        %v734 = vld [vmem:[#allocation13 + $0x48] sm:$0xff]
        %v735 = vld [vmem:[#allocation13 + $0x50] sm:$0xff]
        %v736 = vld [vmem:[#allocation13 + $0x58] sm:$0xff]
        %v737 = vld [vmem:[#allocation13 + $0x60] sm:$0xff]
        %v738 = vld [vmem:[#allocation13 + $0x68] sm:$0xff]
        %v739 = vld [vmem:[#allocation13 + $0x70] sm:$0xff]
        %v740 = vld [vmem:[#allocation13 + $0x78] sm:$0xff]
        %v741 = vld [vmem:[#allocation13 + $0x80] sm:$0xff]
        %v742 = vld [vmem:[#allocation13 + $0x88] sm:$0xff]
        %v743 = vld [vmem:[#allocation13 + $0x90] sm:$0xff]
        %v744 = vld [vmem:[#allocation13 + $0x98] sm:$0xff]
        %v745 = vld [vmem:[#allocation13 + $0xa0] sm:$0xff]
        %v746 = vld [vmem:[#allocation13 + $0xa8] sm:$0xff]
        %v747 = vld [vmem:[#allocation13 + $0xb0] sm:$0xff]
        %v748 = vld [vmem:[#allocation13 + $0xb8] sm:$0xff]
        %v749 = vld [vmem:[#allocation13 + $0xc0] sm:$0xff]
        %v750 = vld [vmem:[#allocation13 + $0xc8] sm:$0xff]
        %v751 = vld [vmem:[#allocation13 + $0xd0] sm:$0xff]
        %v752 = vld [vmem:[#allocation13 + $0xd8] sm:$0xff]
        %v753 = vld [vmem:[#allocation13 + $0xe0] sm:$0xff]
        %v754 = vld [vmem:[#allocation13 + $0xe8] sm:$0xff]
        %v755 = vld [vmem:[#allocation13 + $0xf0] sm:$0xff]
        %v756 = vld [vmem:[#allocation13 + $0xf8] sm:$0xff]
        %v757 = vld [vmem:[#allocation13 + $0x100] sm:$0xff]
        %v758 = vld [vmem:[#allocation13 + $0x108] sm:$0xff]
        %v759 = vld [vmem:[#allocation13 + $0x110] sm:$0xff]
        %v760 = vld [vmem:[#allocation13 + $0x118] sm:$0xff]
        %v761 = vld [vmem:[#allocation13 + $0x120] sm:$0xff]
        %v762 = vld [vmem:[#allocation13 + $0x128] sm:$0xff]
        %v763 = vld [vmem:[#allocation13 + $0x130] sm:$0xff]
        %v764 = vld [vmem:[#allocation13 + $0x138] sm:$0xff]
        %v765 = vld [vmem:[#allocation13 + $0x140] sm:$0xff]
        %v766 = vld [vmem:[#allocation13 + $0x148] sm:$0xff]
        %v767 = vld [vmem:[#allocation13 + $0x150] sm:$0xff]
        %v768 = vld [vmem:[#allocation13 + $0x158] sm:$0xff]
        %v769 = vld [vmem:[#allocation13 + $0x160] sm:$0xff]
        %v770 = vld [vmem:[#allocation13 + $0x168] sm:$0xff]
        %v771 = vld [vmem:[#allocation13 + $0x170] sm:$0xff]
        %v772 = vld [vmem:[#allocation13 + $0x178] sm:$0xff]
        %v773 = vld [vmem:[#allocation13 + $0x180] sm:$0xff]
        %v774 = vld [vmem:[#allocation13 + $0x188] sm:$0xff]
        %v775 = vld [vmem:[#allocation13 + $0x190] sm:$0xff]
        %v776 = vld [vmem:[#allocation13 + $0x198] sm:$0xff]
        %v777 = vld [vmem:[#allocation13 + $0x1a0] sm:$0xff]
        %v778 = vld [vmem:[#allocation13 + $0x1a8] sm:$0xff]
        %v779 = vld [vmem:[#allocation13 + $0x1b0] sm:$0xff]
        %v780 = vld [vmem:[#allocation13 + $0x1b8] sm:$0xff]
        %v781 = vld [vmem:[#allocation13 + $0x1c0] sm:$0xff]
        %v782 = vld [vmem:[#allocation13 + $0x1c8] sm:$0xff]
        %v783 = vld [vmem:[#allocation13 + $0x1d0] sm:$0xff]
        %v784 = vld [vmem:[#allocation13 + $0x1d8] sm:$0xff]
        %v785 = vld [vmem:[#allocation13 + $0x1e0] sm:$0xff]
        %v786 = vld [vmem:[#allocation13 + $0x1e8] sm:$0xff]
        %v787 = vld [vmem:[#allocation13 + $0x1f0] sm:$0xff]
        %v788 = vld [vmem:[#allocation13 + $0x1f8] sm:$0xff]
        %v789 = vld [vmem:[#allocation3 + $0x20] sm:$0xff]
        %v790 = vld [vmem:[#allocation3 + $0x28] sm:$0xff]
        %s791 = scalar_lea.vmem [#allocation13], 512
        %v792 = vld [vmem:[%s791] sm:$0xff]
        %v793 = vld [vmem:[%s791 + $0x8] sm:$0xff]
        %v794 = vld [vmem:[%s791 + $0x10] sm:$0xff]
        %v795 = vld [vmem:[%s791 + $0x18] sm:$0xff]
        %v796 = vld [vmem:[%s791 + $0x20] sm:$0xff]
        %v797 = vld [vmem:[%s791 + $0x28] sm:$0xff]
        %v798 = vld [vmem:[%s791 + $0x30] sm:$0xff]
        %v799 = vld [vmem:[%s791 + $0x38] sm:$0xff]
        %v800 = vld [vmem:[%s791 + $0x40] sm:$0xff]
        %v801 = vld [vmem:[%s791 + $0x48] sm:$0xff]
        %v802 = vld [vmem:[%s791 + $0x50] sm:$0xff]
        %v803 = vld [vmem:[%s791 + $0x58] sm:$0xff]
        %v804 = vld [vmem:[%s791 + $0x60] sm:$0xff]
        %v805 = vld [vmem:[%s791 + $0x68] sm:$0xff]
        %v806 = vld [vmem:[%s791 + $0x70] sm:$0xff]
        %v807 = vld [vmem:[%s791 + $0x78] sm:$0xff]
        %v808 = vld [vmem:[%s791 + $0x80] sm:$0xff]
        %v809 = vld [vmem:[%s791 + $0x88] sm:$0xff]
        %v810 = vld [vmem:[%s791 + $0x90] sm:$0xff]
        %v811 = vld [vmem:[%s791 + $0x98] sm:$0xff]
        %v812 = vld [vmem:[%s791 + $0xa0] sm:$0xff]
        %v813 = vld [vmem:[%s791 + $0xa8] sm:$0xff]
        %v814 = vld [vmem:[%s791 + $0xb0] sm:$0xff]
        %v815 = vld [vmem:[%s791 + $0xb8] sm:$0xff]
        %v816 = vld [vmem:[%s791 + $0xc0] sm:$0xff]
        %v817 = vld [vmem:[%s791 + $0xc8] sm:$0xff]
        %v818 = vld [vmem:[%s791 + $0xd0] sm:$0xff]
        %v819 = vld [vmem:[%s791 + $0xd8] sm:$0xff]
        %v820 = vld [vmem:[%s791 + $0xe0] sm:$0xff]
        %v821 = vld [vmem:[%s791 + $0xe8] sm:$0xff]
        %v822 = vld [vmem:[%s791 + $0xf0] sm:$0xff]
        %v823 = vld [vmem:[%s791 + $0xf8] sm:$0xff]
        %v824 = vld [vmem:[%s791 + $0x100] sm:$0xff]
        %v825 = vld [vmem:[%s791 + $0x108] sm:$0xff]
        %v826 = vld [vmem:[%s791 + $0x110] sm:$0xff]
        %v827 = vld [vmem:[%s791 + $0x118] sm:$0xff]
        %v828 = vld [vmem:[%s791 + $0x120] sm:$0xff]
        %v829 = vld [vmem:[%s791 + $0x128] sm:$0xff]
        %v830 = vld [vmem:[%s791 + $0x130] sm:$0xff]
        %v831 = vld [vmem:[%s791 + $0x138] sm:$0xff]
        %v832 = vld [vmem:[%s791 + $0x140] sm:$0xff]
        %v833 = vld [vmem:[%s791 + $0x148] sm:$0xff]
        %v834 = vld [vmem:[%s791 + $0x150] sm:$0xff]
        %v835 = vld [vmem:[%s791 + $0x158] sm:$0xff]
        %v836 = vld [vmem:[%s791 + $0x160] sm:$0xff]
        %v837 = vld [vmem:[%s791 + $0x168] sm:$0xff]
        %v838 = vld [vmem:[%s791 + $0x170] sm:$0xff]
        %v839 = vld [vmem:[%s791 + $0x178] sm:$0xff]
        %v840 = vld [vmem:[%s791 + $0x180] sm:$0xff]
        %v841 = vld [vmem:[%s791 + $0x188] sm:$0xff]
        %v842 = vld [vmem:[%s791 + $0x190] sm:$0xff]
        %v843 = vld [vmem:[%s791 + $0x198] sm:$0xff]
        %v844 = vld [vmem:[%s791 + $0x1a0] sm:$0xff]
        %v845 = vld [vmem:[%s791 + $0x1a8] sm:$0xff]
        %v846 = vld [vmem:[%s791 + $0x1b0] sm:$0xff]
        %v847 = vld [vmem:[%s791 + $0x1b8] sm:$0xff]
        %v848 = vld [vmem:[%s791 + $0x1c0] sm:$0xff]
        %v849 = vld [vmem:[%s791 + $0x1c8] sm:$0xff]
        %v850 = vld [vmem:[%s791 + $0x1d0] sm:$0xff]
        %v851 = vld [vmem:[%s791 + $0x1d8] sm:$0xff]
        %v852 = vld [vmem:[%s791 + $0x1e0] sm:$0xff]
        %v853 = vld [vmem:[%s791 + $0x1e8] sm:$0xff]
        %v854 = vld [vmem:[%s791 + $0x1f0] sm:$0xff]
        %v855 = vld [vmem:[%s791 + $0x1f8] sm:$0xff]
        %856 = vmatpush.msra.mxu0 %v822
        %857 = vmatpush.msra.mxu0 %v820
        %858 = vmatpush.msra.mxu0 %v818
        %859 = vmatpush.msra.mxu0 %v816
        %860 = vmatpush.msra.mxu0 %v814
        %861 = vmatpush.msra.mxu0 %v812
        %862 = vmatpush.msra.mxu0 %v810
        %863 = vmatpush.msra.mxu0 %v808
        %864 = vmatpush.msra.mxu0 %v806
        %865 = vmatpush.msra.mxu0 %v804
        %866 = vmatpush.msra.mxu0 %v802
        %867 = vmatpush.msra.mxu0 %v800
        %868 = vmatpush.msra.mxu0 %v798
        %869 = vmatpush.msra.mxu0 %v796
        %870 = vmatpush.msra.mxu0 %v794
        %871 = vmatpush.msra.mxu0 %v792
        %872 = vmatmul.f32.gmra.mxu0 %v721
        %v873 = vpop.f32.mrf.mxu0
        %v874 = vadd.f32 0.0, %v873
        %875 = vmatmul.f32.gmra.mxu0 %v789
        %v876 = vpop.f32.mrf.mxu0
        %v877 = vadd.f32 0.0, %v876
        %878 = vdwg.mxu0
        %879 = vmatpush.msra.mxu0 %v854
        %880 = vmatpush.msra.mxu0 %v852
        %881 = vmatpush.msra.mxu0 %v850
        %882 = vmatpush.msra.mxu0 %v848
        %883 = vmatpush.msra.mxu0 %v846
        %884 = vmatpush.msra.mxu0 %v844
        %885 = vmatpush.msra.mxu0 %v842
        %886 = vmatpush.msra.mxu0 %v840
        %887 = vmatpush.msra.mxu0 %v838
        %888 = vmatpush.msra.mxu0 %v836
        %889 = vmatpush.msra.mxu0 %v834
        %890 = vmatpush.msra.mxu0 %v832
        %891 = vmatpush.msra.mxu0 %v830
        %892 = vmatpush.msra.mxu0 %v828
        %893 = vmatpush.msra.mxu0 %v826
        %894 = vmatpush.msra.mxu0 %v824
        %895 = vmatmul.f32.gmra.mxu0 %v722
        %v896 = vpop.f32.mrf.mxu0
        %v897 = vadd.f32 %v874, %v896
        %898 = vmatmul.f32.gmra.mxu0 %v790
        %v899 = vpop.f32.mrf.mxu0
        %v900 = vadd.f32 %v877, %v899
        %901 = vdwg.mxu0
        %902 = vmatpush.msra.mxu0 %v823
        %903 = vmatpush.msra.mxu0 %v821
        %904 = vmatpush.msra.mxu0 %v819
        %905 = vmatpush.msra.mxu0 %v817
        %906 = vmatpush.msra.mxu0 %v815
        %907 = vmatpush.msra.mxu0 %v813
        %908 = vmatpush.msra.mxu0 %v811
        %909 = vmatpush.msra.mxu0 %v809
        %910 = vmatpush.msra.mxu0 %v807
        %911 = vmatpush.msra.mxu0 %v805
        %912 = vmatpush.msra.mxu0 %v803
        %913 = vmatpush.msra.mxu0 %v801
        %914 = vmatpush.msra.mxu0 %v799
        %915 = vmatpush.msra.mxu0 %v797
        %916 = vmatpush.msra.mxu0 %v795
        %917 = vmatpush.msra.mxu0 %v793
        %918 = vmatmul.f32.gmra.mxu0 %v721
        %v919 = vpop.f32.mrf.mxu0
        %v920 = vadd.f32 0.0, %v919
        %921 = vmatmul.f32.gmra.mxu0 %v789
        %v922 = vpop.f32.mrf.mxu0
        %v923 = vadd.f32 0.0, %v922
        %924 = vdwg.mxu0
        %925 = vmatpush.msra.mxu0 %v855
        %926 = vmatpush.msra.mxu0 %v853
        %927 = vmatpush.msra.mxu0 %v851
        %928 = vmatpush.msra.mxu0 %v849
        %929 = vmatpush.msra.mxu0 %v847
        %930 = vmatpush.msra.mxu0 %v845
        %931 = vmatpush.msra.mxu0 %v843
        %932 = vmatpush.msra.mxu0 %v841
        %933 = vmatpush.msra.mxu0 %v839
        %934 = vmatpush.msra.mxu0 %v837
        %935 = vmatpush.msra.mxu0 %v835
        %936 = vmatpush.msra.mxu0 %v833
        %937 = vmatpush.msra.mxu0 %v831
        %938 = vmatpush.msra.mxu0 %v829
        %939 = vmatpush.msra.mxu0 %v827
        %940 = vmatpush.msra.mxu0 %v825
        %941 = vmatmul.f32.gmra.mxu0 %v722
        %v942 = vpop.f32.mrf.mxu0
        %v943 = vadd.f32 %v920, %v942
        %944 = vmatmul.f32.gmra.mxu0 %v790
        %v945 = vpop.f32.mrf.mxu0
        %v946 = vadd.f32 %v923, %v945
        %947 = vdwg.mxu0
        %vm954 = vcmask 1040384
        %v955 = vrot.slane %v719, 7
        %v956 = vrot.slane %v721, 7
        %v957 = vsel %vm954, %v955, %v956
        %v958 = vrot.slane %v720, 7
        %v959 = vrot.slane %v722, 7
        %v960 = vsel %vm954, %v958, %v959
        %v961 = vrot.slane %v723, 7
        %v962 = vsel %vm954, %v956, %v961
        %v963 = vrot.slane %v724, 7
        %v964 = vsel %vm954, %v959, %v963
        %969 = vmatpush.msra.mxu0 %v755
        %970 = vmatpush.msra.mxu0 %v753
        %971 = vmatpush.msra.mxu0 %v751
        %972 = vmatpush.msra.mxu0 %v749
        %973 = vmatpush.msra.mxu0 %v747
        %974 = vmatpush.msra.mxu0 %v745
        %975 = vmatpush.msra.mxu0 %v743
        %976 = vmatpush.msra.mxu0 %v741
        %977 = vmatpush.msra.mxu0 %v739
        %978 = vmatpush.msra.mxu0 %v737
        %979 = vmatpush.msra.mxu0 %v735
        %980 = vmatpush.msra.mxu0 %v733
        %981 = vmatpush.msra.mxu0 %v731
        %982 = vmatpush.msra.mxu0 %v729
        %983 = vmatpush.msra.mxu0 %v727
        %984 = vmatpush.msra.mxu0 %v725
        %985 = vmatmul.f32.gmra.mxu0 %v957
        %v986 = vpop.f32.mrf.mxu0
        %v987 = vadd.f32 %v897, %v986
        %988 = vmatmul.f32.gmra.mxu0 %v962
        %v989 = vpop.f32.mrf.mxu0
        %v990 = vadd.f32 %v900, %v989
        %991 = vdwg.mxu0
        %992 = vmatpush.msra.mxu0 %v787
        %993 = vmatpush.msra.mxu0 %v785
        %994 = vmatpush.msra.mxu0 %v783
        %995 = vmatpush.msra.mxu0 %v781
        %996 = vmatpush.msra.mxu0 %v779
        %997 = vmatpush.msra.mxu0 %v777
        %998 = vmatpush.msra.mxu0 %v775
        %999 = vmatpush.msra.mxu0 %v773
        %1000 = vmatpush.msra.mxu0 %v771
        %1001 = vmatpush.msra.mxu0 %v769
        %1002 = vmatpush.msra.mxu0 %v767
        %1003 = vmatpush.msra.mxu0 %v765
        %1004 = vmatpush.msra.mxu0 %v763
        %1005 = vmatpush.msra.mxu0 %v761
        %1006 = vmatpush.msra.mxu0 %v759
        %1007 = vmatpush.msra.mxu0 %v757
        %1008 = vmatmul.f32.gmra.mxu0 %v960
        %v1009 = vpop.f32.mrf.mxu0
        %v1010 = vadd.f32 %v987, %v1009
        %1011 = vmatmul.f32.gmra.mxu0 %v964
        %v1012 = vpop.f32.mrf.mxu0
        %v1013 = vadd.f32 %v990, %v1012
        %1014 = vdwg.mxu0
        %1015 = vmatpush.msra.mxu0 %v756
        %1016 = vmatpush.msra.mxu0 %v754
        %1017 = vmatpush.msra.mxu0 %v752
        %1018 = vmatpush.msra.mxu0 %v750
        %1019 = vmatpush.msra.mxu0 %v748
        %1020 = vmatpush.msra.mxu0 %v746
        %1021 = vmatpush.msra.mxu0 %v744
        %1022 = vmatpush.msra.mxu0 %v742
        %1023 = vmatpush.msra.mxu0 %v740
        %1024 = vmatpush.msra.mxu0 %v738
        %1025 = vmatpush.msra.mxu0 %v736
        %1026 = vmatpush.msra.mxu0 %v734
        %1027 = vmatpush.msra.mxu0 %v732
        %1028 = vmatpush.msra.mxu0 %v730
        %1029 = vmatpush.msra.mxu0 %v728
        %1030 = vmatpush.msra.mxu0 %v726
        %1031 = vmatmul.f32.gmra.mxu0 %v957
        %v1032 = vpop.f32.mrf.mxu0
        %v1033 = vadd.f32 %v943, %v1032
        %1034 = vmatmul.f32.gmra.mxu0 %v962
        %v1035 = vpop.f32.mrf.mxu0
        %v1036 = vadd.f32 %v946, %v1035
        %1037 = vdwg.mxu0
        %1038 = vmatpush.msra.mxu0 %v788
        %1039 = vmatpush.msra.mxu0 %v786
        %1040 = vmatpush.msra.mxu0 %v784
        %1041 = vmatpush.msra.mxu0 %v782
        %1042 = vmatpush.msra.mxu0 %v780
        %1043 = vmatpush.msra.mxu0 %v778
        %1044 = vmatpush.msra.mxu0 %v776
        %1045 = vmatpush.msra.mxu0 %v774
        %1046 = vmatpush.msra.mxu0 %v772
        %1047 = vmatpush.msra.mxu0 %v770
        %1048 = vmatpush.msra.mxu0 %v768
        %1049 = vmatpush.msra.mxu0 %v766
        %1050 = vmatpush.msra.mxu0 %v764
        %1051 = vmatpush.msra.mxu0 %v762
        %1052 = vmatpush.msra.mxu0 %v760
        %1053 = vmatpush.msra.mxu0 %v758
        %1054 = vmatmul.f32.gmra.mxu0 %v960
        %v1055 = vpop.f32.mrf.mxu0
        %v1056 = vadd.f32 %v1033, %v1055
        %1057 = vmatmul.f32.gmra.mxu0 %v964
        %v1058 = vpop.f32.mrf.mxu0
        %v1059 = vadd.f32 %v1036, %v1058
        %1060 = vdwg.mxu0
        %v1061 = vld [vmem:[#allocation3 + $0x10] sm:$0xfe]
        %v1062 = vld [vmem:[#allocation3 + $0x18] sm:$0xfe]
        %v1063 = vld [vmem:[#allocation3 + $0x20] sm:$0xff]
        %v1064 = vld [vmem:[#allocation3 + $0x28] sm:$0xff]
        %v1065 = vld [vmem:[#allocation3 + $0x30] sm:$0x1]
        %v1066 = vld [vmem:[#allocation3 + $0x38] sm:$0x1]
        %s1067 = scalar_lea.vmem [#allocation13], 1024
        %v1068 = vld [vmem:[%s1067] sm:$0xff]
        %v1069 = vld [vmem:[%s1067 + $0x8] sm:$0xff]
        %v1070 = vld [vmem:[%s1067 + $0x10] sm:$0xff]
        %v1071 = vld [vmem:[%s1067 + $0x18] sm:$0xff]
        %v1072 = vld [vmem:[%s1067 + $0x20] sm:$0xff]
        %v1073 = vld [vmem:[%s1067 + $0x28] sm:$0xff]
        %v1074 = vld [vmem:[%s1067 + $0x30] sm:$0xff]
        %v1075 = vld [vmem:[%s1067 + $0x38] sm:$0xff]
        %v1076 = vld [vmem:[%s1067 + $0x40] sm:$0xff]
        %v1077 = vld [vmem:[%s1067 + $0x48] sm:$0xff]
        %v1078 = vld [vmem:[%s1067 + $0x50] sm:$0xff]
        %v1079 = vld [vmem:[%s1067 + $0x58] sm:$0xff]
        %v1080 = vld [vmem:[%s1067 + $0x60] sm:$0xff]
        %v1081 = vld [vmem:[%s1067 + $0x68] sm:$0xff]
        %v1082 = vld [vmem:[%s1067 + $0x70] sm:$0xff]
        %v1083 = vld [vmem:[%s1067 + $0x78] sm:$0xff]
        %v1084 = vld [vmem:[%s1067 + $0x80] sm:$0xff]
        %v1085 = vld [vmem:[%s1067 + $0x88] sm:$0xff]
        %v1086 = vld [vmem:[%s1067 + $0x90] sm:$0xff]
        %v1087 = vld [vmem:[%s1067 + $0x98] sm:$0xff]
        %v1088 = vld [vmem:[%s1067 + $0xa0] sm:$0xff]
        %v1089 = vld [vmem:[%s1067 + $0xa8] sm:$0xff]
        %v1090 = vld [vmem:[%s1067 + $0xb0] sm:$0xff]
        %v1091 = vld [vmem:[%s1067 + $0xb8] sm:$0xff]
        %v1092 = vld [vmem:[%s1067 + $0xc0] sm:$0xff]
        %v1093 = vld [vmem:[%s1067 + $0xc8] sm:$0xff]
        %v1094 = vld [vmem:[%s1067 + $0xd0] sm:$0xff]
        %v1095 = vld [vmem:[%s1067 + $0xd8] sm:$0xff]
        %v1096 = vld [vmem:[%s1067 + $0xe0] sm:$0xff]
        %v1097 = vld [vmem:[%s1067 + $0xe8] sm:$0xff]
        %v1098 = vld [vmem:[%s1067 + $0xf0] sm:$0xff]
        %v1099 = vld [vmem:[%s1067 + $0xf8] sm:$0xff]
        %v1100 = vld [vmem:[%s1067 + $0x100] sm:$0xff]
        %v1101 = vld [vmem:[%s1067 + $0x108] sm:$0xff]
        %v1102 = vld [vmem:[%s1067 + $0x110] sm:$0xff]
        %v1103 = vld [vmem:[%s1067 + $0x118] sm:$0xff]
        %v1104 = vld [vmem:[%s1067 + $0x120] sm:$0xff]
        %v1105 = vld [vmem:[%s1067 + $0x128] sm:$0xff]
        %v1106 = vld [vmem:[%s1067 + $0x130] sm:$0xff]
        %v1107 = vld [vmem:[%s1067 + $0x138] sm:$0xff]
        %v1108 = vld [vmem:[%s1067 + $0x140] sm:$0xff]
        %v1109 = vld [vmem:[%s1067 + $0x148] sm:$0xff]
        %v1110 = vld [vmem:[%s1067 + $0x150] sm:$0xff]
        %v1111 = vld [vmem:[%s1067 + $0x158] sm:$0xff]
        %v1112 = vld [vmem:[%s1067 + $0x160] sm:$0xff]
        %v1113 = vld [vmem:[%s1067 + $0x168] sm:$0xff]
        %v1114 = vld [vmem:[%s1067 + $0x170] sm:$0xff]
        %v1115 = vld [vmem:[%s1067 + $0x178] sm:$0xff]
        %v1116 = vld [vmem:[%s1067 + $0x180] sm:$0xff]
        %v1117 = vld [vmem:[%s1067 + $0x188] sm:$0xff]
        %v1118 = vld [vmem:[%s1067 + $0x190] sm:$0xff]
        %v1119 = vld [vmem:[%s1067 + $0x198] sm:$0xff]
        %v1120 = vld [vmem:[%s1067 + $0x1a0] sm:$0xff]
        %v1121 = vld [vmem:[%s1067 + $0x1a8] sm:$0xff]
        %v1122 = vld [vmem:[%s1067 + $0x1b0] sm:$0xff]
        %v1123 = vld [vmem:[%s1067 + $0x1b8] sm:$0xff]
        %v1124 = vld [vmem:[%s1067 + $0x1c0] sm:$0xff]
        %v1125 = vld [vmem:[%s1067 + $0x1c8] sm:$0xff]
        %v1126 = vld [vmem:[%s1067 + $0x1d0] sm:$0xff]
        %v1127 = vld [vmem:[%s1067 + $0x1d8] sm:$0xff]
        %v1128 = vld [vmem:[%s1067 + $0x1e0] sm:$0xff]
        %v1129 = vld [vmem:[%s1067 + $0x1e8] sm:$0xff]
        %v1130 = vld [vmem:[%s1067 + $0x1f0] sm:$0xff]
        %v1131 = vld [vmem:[%s1067 + $0x1f8] sm:$0xff]
        %vm1138 = vcmask 1046528
        %v1139 = vrot.slane %v1061, 1
        %v1140 = vrot.slane %v1063, 1
        %v1141 = vsel %vm1138, %v1139, %v1140
        %v1142 = vrot.slane %v1062, 1
        %v1143 = vrot.slane %v1064, 1
        %v1144 = vsel %vm1138, %v1142, %v1143
        %v1145 = vrot.slane %v1065, 1
        %v1146 = vsel %vm1138, %v1140, %v1145
        %v1147 = vrot.slane %v1066, 1
        %v1148 = vsel %vm1138, %v1143, %v1147
        %1153 = vmatpush.msra.mxu0 %v1098
        %1154 = vmatpush.msra.mxu0 %v1096
        %1155 = vmatpush.msra.mxu0 %v1094
        %1156 = vmatpush.msra.mxu0 %v1092
        %1157 = vmatpush.msra.mxu0 %v1090
        %1158 = vmatpush.msra.mxu0 %v1088
        %1159 = vmatpush.msra.mxu0 %v1086
        %1160 = vmatpush.msra.mxu0 %v1084
        %1161 = vmatpush.msra.mxu0 %v1082
        %1162 = vmatpush.msra.mxu0 %v1080
        %1163 = vmatpush.msra.mxu0 %v1078
        %1164 = vmatpush.msra.mxu0 %v1076
        %1165 = vmatpush.msra.mxu0 %v1074
        %1166 = vmatpush.msra.mxu0 %v1072
        %1167 = vmatpush.msra.mxu0 %v1070
        %1168 = vmatpush.msra.mxu0 %v1068
        %1169 = vmatmul.f32.gmra.mxu0 %v1141
        %v1170 = vpop.f32.mrf.mxu0
        %v1171 = vadd.f32 0.0, %v1170
        %1172 = vmatmul.f32.gmra.mxu0 %v1146
        %v1173 = vpop.f32.mrf.mxu0
        %v1174 = vadd.f32 0.0, %v1173
        %1175 = vdwg.mxu0
        %1176 = vmatpush.msra.mxu0 %v1130
        %1177 = vmatpush.msra.mxu0 %v1128
        %1178 = vmatpush.msra.mxu0 %v1126
        %1179 = vmatpush.msra.mxu0 %v1124
        %1180 = vmatpush.msra.mxu0 %v1122
        %1181 = vmatpush.msra.mxu0 %v1120
        %1182 = vmatpush.msra.mxu0 %v1118
        %1183 = vmatpush.msra.mxu0 %v1116
        %1184 = vmatpush.msra.mxu0 %v1114
        %1185 = vmatpush.msra.mxu0 %v1112
        %1186 = vmatpush.msra.mxu0 %v1110
        %1187 = vmatpush.msra.mxu0 %v1108
        %1188 = vmatpush.msra.mxu0 %v1106
        %1189 = vmatpush.msra.mxu0 %v1104
        %1190 = vmatpush.msra.mxu0 %v1102
        %1191 = vmatpush.msra.mxu0 %v1100
        %1192 = vmatmul.f32.gmra.mxu0 %v1144
        %v1193 = vpop.f32.mrf.mxu0
        %v1194 = vadd.f32 %v1171, %v1193
        %1195 = vmatmul.f32.gmra.mxu0 %v1148
        %v1196 = vpop.f32.mrf.mxu0
        %v1197 = vadd.f32 %v1174, %v1196
        %1198 = vdwg.mxu0
        %1199 = vmatpush.msra.mxu0 %v1099
        %1200 = vmatpush.msra.mxu0 %v1097
        %1201 = vmatpush.msra.mxu0 %v1095
        %1202 = vmatpush.msra.mxu0 %v1093
        %1203 = vmatpush.msra.mxu0 %v1091
        %1204 = vmatpush.msra.mxu0 %v1089
        %1205 = vmatpush.msra.mxu0 %v1087
        %1206 = vmatpush.msra.mxu0 %v1085
        %1207 = vmatpush.msra.mxu0 %v1083
        %1208 = vmatpush.msra.mxu0 %v1081
        %1209 = vmatpush.msra.mxu0 %v1079
        %1210 = vmatpush.msra.mxu0 %v1077
        %1211 = vmatpush.msra.mxu0 %v1075
        %1212 = vmatpush.msra.mxu0 %v1073
        %1213 = vmatpush.msra.mxu0 %v1071
        %1214 = vmatpush.msra.mxu0 %v1069
        %1215 = vmatmul.f32.gmra.mxu0 %v1141
        %v1216 = vpop.f32.mrf.mxu0
        %v1217 = vadd.f32 0.0, %v1216
        %1218 = vmatmul.f32.gmra.mxu0 %v1146
        %v1219 = vpop.f32.mrf.mxu0
        %v1220 = vadd.f32 0.0, %v1219
        %1221 = vdwg.mxu0
        %1222 = vmatpush.msra.mxu0 %v1131
        %1223 = vmatpush.msra.mxu0 %v1129
        %1224 = vmatpush.msra.mxu0 %v1127
        %1225 = vmatpush.msra.mxu0 %v1125
        %1226 = vmatpush.msra.mxu0 %v1123
        %1227 = vmatpush.msra.mxu0 %v1121
        %1228 = vmatpush.msra.mxu0 %v1119
        %1229 = vmatpush.msra.mxu0 %v1117
        %1230 = vmatpush.msra.mxu0 %v1115
        %1231 = vmatpush.msra.mxu0 %v1113
        %1232 = vmatpush.msra.mxu0 %v1111
        %1233 = vmatpush.msra.mxu0 %v1109
        %1234 = vmatpush.msra.mxu0 %v1107
        %1235 = vmatpush.msra.mxu0 %v1105
        %1236 = vmatpush.msra.mxu0 %v1103
        %1237 = vmatpush.msra.mxu0 %v1101
        %1238 = vmatmul.f32.gmra.mxu0 %v1144
        %v1239 = vpop.f32.mrf.mxu0
        %v1240 = vadd.f32 %v1217, %v1239
        %1241 = vmatmul.f32.gmra.mxu0 %v1148
        %v1242 = vpop.f32.mrf.mxu0
        %v1243 = vadd.f32 %v1220, %v1242
        %1244 = vdwg.mxu0
        %v1245 = vadd.f32 %v1010, %v1194
        %v1246 = vadd.f32 %v1056, %v1240
        %v1247 = vadd.f32 %v1013, %v1197
        %v1248 = vadd.f32 %v1059, %v1243
        %v1249 = vld [vmem:[#allocation15] ss:$2 sm:$0x3]
        %v1251 = vperm.slane %v1249, 0
        %v1252 = vperm.slane %v1249, 1
        %v1255 = vmul.f32 %v1245, %v1251
        %v1256 = vmul.f32 %v1246, %v1252
        %v1257 = vmul.f32 %v1247, %v1251
        %v1258 = vmul.f32 %v1248, %v1252
        %v1259 = vld [vmem:[#allocation16] ss:$2 sm:$0x3]
        %v1261 = vperm.slane %v1259, 0
        %v1262 = vperm.slane %v1259, 1
        %v1265 = vadd.f32 %v1255, %v1261
        %v1266 = vadd.f32 %v1256, %v1262
        %v1267 = vadd.f32 %v1257, %v1261
        %v1268 = vadd.f32 %v1258, %v1262
        %vm1269 = vcmp.gt.f32.partialorder %v1265, 0.0
        %vm1270 = vcmp.gt.f32.partialorder %v1266, 0.0
        %vm1271 = vcmp.gt.f32.partialorder %v1267, 0.0
        %vm1272 = vcmp.gt.f32.partialorder %v1268, 0.0
        %v1273 = vmul.f32 %v1265, 1.442695
        %v1274 = vpow.pop %v1273
        %v1275 = vmul.f32 %v1266, 1.442695
        %v1276 = vpow.pop %v1275
        %v1277 = vmul.f32 %v1267, 1.442695
        %v1278 = vpow.pop %v1277
        %v1279 = vmul.f32 %v1268, 1.442695
        %v1280 = vpow.pop %v1279
        %v1281 = vsub.f32 %v1274, 1.0
        %v1282 = vsub.f32 %v1276, 1.0
        %v1283 = vsub.f32 %v1278, 1.0
        %v1284 = vsub.f32 %v1280, 1.0
        %v1285 = vsel %vm1269, %v1265, %v1281
        %v1286 = vsel %vm1270, %v1266, %v1282
        %v1287 = vsel %vm1271, %v1267, %v1283
        %v1288 = vsel %vm1272, %v1268, %v1284
        %1289 = vst [vmem:[#allocation3 + $0x10] sm:$0xff] %v1285
        %1290 = vst [vmem:[#allocation3 + $0x18] sm:$0xff] %v1286
        %1291 = vst [vmem:[#allocation3 + $0x20] sm:$0xff] %v1287
        %1292 = vst [vmem:[#allocation3 + $0x28] sm:$0xff] %v1288
        %v1293 = vld [vmem:[#allocation3] sm:$0x80]
        %v1294 = vld [vmem:[#allocation3 + $0x8] sm:$0x80]
        %v1295 = vld [vmem:[#allocation3 + $0x10] sm:$0xff]
        %v1296 = vld [vmem:[#allocation3 + $0x18] sm:$0xff]
        %v1297 = vld [vmem:[#allocation3 + $0x20] sm:$0x7f]
        %v1298 = vld [vmem:[#allocation3 + $0x28] sm:$0x7f]
        %s1299 = scalar_lea.vmem [#allocation13], 1536
        %v1300 = vld [vmem:[%s1299] sm:$0xff]
        %v1301 = vld [vmem:[%s1299 + $0x8] sm:$0xff]
        %v1302 = vld [vmem:[%s1299 + $0x10] sm:$0xff]
        %v1303 = vld [vmem:[%s1299 + $0x18] sm:$0xff]
        %v1304 = vld [vmem:[%s1299 + $0x20] sm:$0xff]
        %v1305 = vld [vmem:[%s1299 + $0x28] sm:$0xff]
        %v1306 = vld [vmem:[%s1299 + $0x30] sm:$0xff]
        %v1307 = vld [vmem:[%s1299 + $0x38] sm:$0xff]
        %v1308 = vld [vmem:[%s1299 + $0x40] sm:$0xff]
        %v1309 = vld [vmem:[%s1299 + $0x48] sm:$0xff]
        %v1310 = vld [vmem:[%s1299 + $0x50] sm:$0xff]
        %v1311 = vld [vmem:[%s1299 + $0x58] sm:$0xff]
        %v1312 = vld [vmem:[%s1299 + $0x60] sm:$0xff]
        %v1313 = vld [vmem:[%s1299 + $0x68] sm:$0xff]
        %v1314 = vld [vmem:[%s1299 + $0x70] sm:$0xff]
        %v1315 = vld [vmem:[%s1299 + $0x78] sm:$0xff]
        %v1316 = vld [vmem:[%s1299 + $0x80] sm:$0xff]
        %v1317 = vld [vmem:[%s1299 + $0x88] sm:$0xff]
        %v1318 = vld [vmem:[%s1299 + $0x90] sm:$0xff]
        %v1319 = vld [vmem:[%s1299 + $0x98] sm:$0xff]
        %v1320 = vld [vmem:[%s1299 + $0xa0] sm:$0xff]
        %v1321 = vld [vmem:[%s1299 + $0xa8] sm:$0xff]
        %v1322 = vld [vmem:[%s1299 + $0xb0] sm:$0xff]
        %v1323 = vld [vmem:[%s1299 + $0xb8] sm:$0xff]
        %v1324 = vld [vmem:[%s1299 + $0xc0] sm:$0xff]
        %v1325 = vld [vmem:[%s1299 + $0xc8] sm:$0xff]
        %v1326 = vld [vmem:[%s1299 + $0xd0] sm:$0xff]
        %v1327 = vld [vmem:[%s1299 + $0xd8] sm:$0xff]
        %v1328 = vld [vmem:[%s1299 + $0xe0] sm:$0xff]
        %v1329 = vld [vmem:[%s1299 + $0xe8] sm:$0xff]
        %v1330 = vld [vmem:[%s1299 + $0xf0] sm:$0xff]
        %v1331 = vld [vmem:[%s1299 + $0xf8] sm:$0xff]
        %v1332 = vld [vmem:[%s1299 + $0x100] sm:$0xff]
        %v1333 = vld [vmem:[%s1299 + $0x108] sm:$0xff]
        %v1334 = vld [vmem:[%s1299 + $0x110] sm:$0xff]
        %v1335 = vld [vmem:[%s1299 + $0x118] sm:$0xff]
        %v1336 = vld [vmem:[%s1299 + $0x120] sm:$0xff]
        %v1337 = vld [vmem:[%s1299 + $0x128] sm:$0xff]
        %v1338 = vld [vmem:[%s1299 + $0x130] sm:$0xff]
        %v1339 = vld [vmem:[%s1299 + $0x138] sm:$0xff]
        %v1340 = vld [vmem:[%s1299 + $0x140] sm:$0xff]
        %v1341 = vld [vmem:[%s1299 + $0x148] sm:$0xff]
        %v1342 = vld [vmem:[%s1299 + $0x150] sm:$0xff]
        %v1343 = vld [vmem:[%s1299 + $0x158] sm:$0xff]
        %v1344 = vld [vmem:[%s1299 + $0x160] sm:$0xff]
        %v1345 = vld [vmem:[%s1299 + $0x168] sm:$0xff]
        %v1346 = vld [vmem:[%s1299 + $0x170] sm:$0xff]
        %v1347 = vld [vmem:[%s1299 + $0x178] sm:$0xff]
        %v1348 = vld [vmem:[%s1299 + $0x180] sm:$0xff]
        %v1349 = vld [vmem:[%s1299 + $0x188] sm:$0xff]
        %v1350 = vld [vmem:[%s1299 + $0x190] sm:$0xff]
        %v1351 = vld [vmem:[%s1299 + $0x198] sm:$0xff]
        %v1352 = vld [vmem:[%s1299 + $0x1a0] sm:$0xff]
        %v1353 = vld [vmem:[%s1299 + $0x1a8] sm:$0xff]
        %v1354 = vld [vmem:[%s1299 + $0x1b0] sm:$0xff]
        %v1355 = vld [vmem:[%s1299 + $0x1b8] sm:$0xff]
        %v1356 = vld [vmem:[%s1299 + $0x1c0] sm:$0xff]
        %v1357 = vld [vmem:[%s1299 + $0x1c8] sm:$0xff]
        %v1358 = vld [vmem:[%s1299 + $0x1d0] sm:$0xff]
        %v1359 = vld [vmem:[%s1299 + $0x1d8] sm:$0xff]
        %v1360 = vld [vmem:[%s1299 + $0x1e0] sm:$0xff]
        %v1361 = vld [vmem:[%s1299 + $0x1e8] sm:$0xff]
        %v1362 = vld [vmem:[%s1299 + $0x1f0] sm:$0xff]
        %v1363 = vld [vmem:[%s1299 + $0x1f8] sm:$0xff]
        %v1364 = vld [vmem:[#allocation3 + $0x20] sm:$0xff]
        %v1365 = vld [vmem:[#allocation3 + $0x28] sm:$0xff]
        %s1366 = scalar_lea.vmem [#allocation13], 2048
        %v1367 = vld [vmem:[%s1366] sm:$0xff]
        %v1368 = vld [vmem:[%s1366 + $0x8] sm:$0xff]
        %v1369 = vld [vmem:[%s1366 + $0x10] sm:$0xff]
        %v1370 = vld [vmem:[%s1366 + $0x18] sm:$0xff]
        %v1371 = vld [vmem:[%s1366 + $0x20] sm:$0xff]
        %v1372 = vld [vmem:[%s1366 + $0x28] sm:$0xff]
        %v1373 = vld [vmem:[%s1366 + $0x30] sm:$0xff]
        %v1374 = vld [vmem:[%s1366 + $0x38] sm:$0xff]
        %v1375 = vld [vmem:[%s1366 + $0x40] sm:$0xff]
        %v1376 = vld [vmem:[%s1366 + $0x48] sm:$0xff]
        %v1377 = vld [vmem:[%s1366 + $0x50] sm:$0xff]
        %v1378 = vld [vmem:[%s1366 + $0x58] sm:$0xff]
        %v1379 = vld [vmem:[%s1366 + $0x60] sm:$0xff]
        %v1380 = vld [vmem:[%s1366 + $0x68] sm:$0xff]
        %v1381 = vld [vmem:[%s1366 + $0x70] sm:$0xff]
        %v1382 = vld [vmem:[%s1366 + $0x78] sm:$0xff]
        %v1383 = vld [vmem:[%s1366 + $0x80] sm:$0xff]
        %v1384 = vld [vmem:[%s1366 + $0x88] sm:$0xff]
        %v1385 = vld [vmem:[%s1366 + $0x90] sm:$0xff]
        %v1386 = vld [vmem:[%s1366 + $0x98] sm:$0xff]
        %v1387 = vld [vmem:[%s1366 + $0xa0] sm:$0xff]
        %v1388 = vld [vmem:[%s1366 + $0xa8] sm:$0xff]
        %v1389 = vld [vmem:[%s1366 + $0xb0] sm:$0xff]
        %v1390 = vld [vmem:[%s1366 + $0xb8] sm:$0xff]
        %v1391 = vld [vmem:[%s1366 + $0xc0] sm:$0xff]
        %v1392 = vld [vmem:[%s1366 + $0xc8] sm:$0xff]
        %v1393 = vld [vmem:[%s1366 + $0xd0] sm:$0xff]
        %v1394 = vld [vmem:[%s1366 + $0xd8] sm:$0xff]
        %v1395 = vld [vmem:[%s1366 + $0xe0] sm:$0xff]
        %v1396 = vld [vmem:[%s1366 + $0xe8] sm:$0xff]
        %v1397 = vld [vmem:[%s1366 + $0xf0] sm:$0xff]
        %v1398 = vld [vmem:[%s1366 + $0xf8] sm:$0xff]
        %v1399 = vld [vmem:[%s1366 + $0x100] sm:$0xff]
        %v1400 = vld [vmem:[%s1366 + $0x108] sm:$0xff]
        %v1401 = vld [vmem:[%s1366 + $0x110] sm:$0xff]
        %v1402 = vld [vmem:[%s1366 + $0x118] sm:$0xff]
        %v1403 = vld [vmem:[%s1366 + $0x120] sm:$0xff]
        %v1404 = vld [vmem:[%s1366 + $0x128] sm:$0xff]
        %v1405 = vld [vmem:[%s1366 + $0x130] sm:$0xff]
        %v1406 = vld [vmem:[%s1366 + $0x138] sm:$0xff]
        %v1407 = vld [vmem:[%s1366 + $0x140] sm:$0xff]
        %v1408 = vld [vmem:[%s1366 + $0x148] sm:$0xff]
        %v1409 = vld [vmem:[%s1366 + $0x150] sm:$0xff]
        %v1410 = vld [vmem:[%s1366 + $0x158] sm:$0xff]
        %v1411 = vld [vmem:[%s1366 + $0x160] sm:$0xff]
        %v1412 = vld [vmem:[%s1366 + $0x168] sm:$0xff]
        %v1413 = vld [vmem:[%s1366 + $0x170] sm:$0xff]
        %v1414 = vld [vmem:[%s1366 + $0x178] sm:$0xff]
        %v1415 = vld [vmem:[%s1366 + $0x180] sm:$0xff]
        %v1416 = vld [vmem:[%s1366 + $0x188] sm:$0xff]
        %v1417 = vld [vmem:[%s1366 + $0x190] sm:$0xff]
        %v1418 = vld [vmem:[%s1366 + $0x198] sm:$0xff]
        %v1419 = vld [vmem:[%s1366 + $0x1a0] sm:$0xff]
        %v1420 = vld [vmem:[%s1366 + $0x1a8] sm:$0xff]
        %v1421 = vld [vmem:[%s1366 + $0x1b0] sm:$0xff]
        %v1422 = vld [vmem:[%s1366 + $0x1b8] sm:$0xff]
        %v1423 = vld [vmem:[%s1366 + $0x1c0] sm:$0xff]
        %v1424 = vld [vmem:[%s1366 + $0x1c8] sm:$0xff]
        %v1425 = vld [vmem:[%s1366 + $0x1d0] sm:$0xff]
        %v1426 = vld [vmem:[%s1366 + $0x1d8] sm:$0xff]
        %v1427 = vld [vmem:[%s1366 + $0x1e0] sm:$0xff]
        %v1428 = vld [vmem:[%s1366 + $0x1e8] sm:$0xff]
        %v1429 = vld [vmem:[%s1366 + $0x1f0] sm:$0xff]
        %v1430 = vld [vmem:[%s1366 + $0x1f8] sm:$0xff]
        %1431 = vmatpush.msra.mxu0 %v1397
        %1432 = vmatpush.msra.mxu0 %v1395
        %1433 = vmatpush.msra.mxu0 %v1393
        %1434 = vmatpush.msra.mxu0 %v1391
        %1435 = vmatpush.msra.mxu0 %v1389
        %1436 = vmatpush.msra.mxu0 %v1387
        %1437 = vmatpush.msra.mxu0 %v1385
        %1438 = vmatpush.msra.mxu0 %v1383
        %1439 = vmatpush.msra.mxu0 %v1381
        %1440 = vmatpush.msra.mxu0 %v1379
        %1441 = vmatpush.msra.mxu0 %v1377
        %1442 = vmatpush.msra.mxu0 %v1375
        %1443 = vmatpush.msra.mxu0 %v1373
        %1444 = vmatpush.msra.mxu0 %v1371
        %1445 = vmatpush.msra.mxu0 %v1369
        %1446 = vmatpush.msra.mxu0 %v1367
        %1447 = vmatmul.f32.gmra.mxu0 %v1295
        %v1448 = vpop.f32.mrf.mxu0
        %v1449 = vadd.f32 0.0, %v1448
        %1450 = vmatmul.f32.gmra.mxu0 %v1364
        %v1451 = vpop.f32.mrf.mxu0
        %v1452 = vadd.f32 0.0, %v1451
        %1453 = vdwg.mxu0
        %1454 = vmatpush.msra.mxu0 %v1429
        %1455 = vmatpush.msra.mxu0 %v1427
        %1456 = vmatpush.msra.mxu0 %v1425
        %1457 = vmatpush.msra.mxu0 %v1423
        %1458 = vmatpush.msra.mxu0 %v1421
        %1459 = vmatpush.msra.mxu0 %v1419
        %1460 = vmatpush.msra.mxu0 %v1417
        %1461 = vmatpush.msra.mxu0 %v1415
        %1462 = vmatpush.msra.mxu0 %v1413
        %1463 = vmatpush.msra.mxu0 %v1411
        %1464 = vmatpush.msra.mxu0 %v1409
        %1465 = vmatpush.msra.mxu0 %v1407
        %1466 = vmatpush.msra.mxu0 %v1405
        %1467 = vmatpush.msra.mxu0 %v1403
        %1468 = vmatpush.msra.mxu0 %v1401
        %1469 = vmatpush.msra.mxu0 %v1399
        %1470 = vmatmul.f32.gmra.mxu0 %v1296
        %v1471 = vpop.f32.mrf.mxu0
        %v1472 = vadd.f32 %v1449, %v1471
        %1473 = vmatmul.f32.gmra.mxu0 %v1365
        %v1474 = vpop.f32.mrf.mxu0
        %v1475 = vadd.f32 %v1452, %v1474
        %1476 = vdwg.mxu0
        %1477 = vmatpush.msra.mxu0 %v1398
        %1478 = vmatpush.msra.mxu0 %v1396
        %1479 = vmatpush.msra.mxu0 %v1394
        %1480 = vmatpush.msra.mxu0 %v1392
        %1481 = vmatpush.msra.mxu0 %v1390
        %1482 = vmatpush.msra.mxu0 %v1388
        %1483 = vmatpush.msra.mxu0 %v1386
        %1484 = vmatpush.msra.mxu0 %v1384
        %1485 = vmatpush.msra.mxu0 %v1382
        %1486 = vmatpush.msra.mxu0 %v1380
        %1487 = vmatpush.msra.mxu0 %v1378
        %1488 = vmatpush.msra.mxu0 %v1376
        %1489 = vmatpush.msra.mxu0 %v1374
        %1490 = vmatpush.msra.mxu0 %v1372
        %1491 = vmatpush.msra.mxu0 %v1370
        %1492 = vmatpush.msra.mxu0 %v1368
        %1493 = vmatmul.f32.gmra.mxu0 %v1295
        %v1494 = vpop.f32.mrf.mxu0
        %v1495 = vadd.f32 0.0, %v1494
        %1496 = vmatmul.f32.gmra.mxu0 %v1364
        %v1497 = vpop.f32.mrf.mxu0
        %v1498 = vadd.f32 0.0, %v1497
        %1499 = vdwg.mxu0
        %1500 = vmatpush.msra.mxu0 %v1430
        %1501 = vmatpush.msra.mxu0 %v1428
        %1502 = vmatpush.msra.mxu0 %v1426
        %1503 = vmatpush.msra.mxu0 %v1424
        %1504 = vmatpush.msra.mxu0 %v1422
        %1505 = vmatpush.msra.mxu0 %v1420
        %1506 = vmatpush.msra.mxu0 %v1418
        %1507 = vmatpush.msra.mxu0 %v1416
        %1508 = vmatpush.msra.mxu0 %v1414
        %1509 = vmatpush.msra.mxu0 %v1412
        %1510 = vmatpush.msra.mxu0 %v1410
        %1511 = vmatpush.msra.mxu0 %v1408
        %1512 = vmatpush.msra.mxu0 %v1406
        %1513 = vmatpush.msra.mxu0 %v1404
        %1514 = vmatpush.msra.mxu0 %v1402
        %1515 = vmatpush.msra.mxu0 %v1400
        %1516 = vmatmul.f32.gmra.mxu0 %v1296
        %v1517 = vpop.f32.mrf.mxu0
        %v1518 = vadd.f32 %v1495, %v1517
        %1519 = vmatmul.f32.gmra.mxu0 %v1365
        %v1520 = vpop.f32.mrf.mxu0
        %v1521 = vadd.f32 %v1498, %v1520
        %1522 = vdwg.mxu0
        %v1529 = vrot.slane %v1293, 7
        %v1530 = vrot.slane %v1295, 7
        %v1531 = vsel %vm954, %v1529, %v1530
        %v1532 = vrot.slane %v1294, 7
        %v1533 = vrot.slane %v1296, 7
        %v1534 = vsel %vm954, %v1532, %v1533
        %v1535 = vrot.slane %v1297, 7
        %v1536 = vsel %vm954, %v1530, %v1535
        %v1537 = vrot.slane %v1298, 7
        %v1538 = vsel %vm954, %v1533, %v1537
        %1543 = vmatpush.msra.mxu0 %v1330
        %1544 = vmatpush.msra.mxu0 %v1328
        %1545 = vmatpush.msra.mxu0 %v1326
        %1546 = vmatpush.msra.mxu0 %v1324
        %1547 = vmatpush.msra.mxu0 %v1322
        %1548 = vmatpush.msra.mxu0 %v1320
        %1549 = vmatpush.msra.mxu0 %v1318
        %1550 = vmatpush.msra.mxu0 %v1316
        %1551 = vmatpush.msra.mxu0 %v1314
        %1552 = vmatpush.msra.mxu0 %v1312
        %1553 = vmatpush.msra.mxu0 %v1310
        %1554 = vmatpush.msra.mxu0 %v1308
        %1555 = vmatpush.msra.mxu0 %v1306
        %1556 = vmatpush.msra.mxu0 %v1304
        %1557 = vmatpush.msra.mxu0 %v1302
        %1558 = vmatpush.msra.mxu0 %v1300
        %1559 = vmatmul.f32.gmra.mxu0 %v1531
        %v1560 = vpop.f32.mrf.mxu0
        %v1561 = vadd.f32 %v1472, %v1560
        %1562 = vmatmul.f32.gmra.mxu0 %v1536
        %v1563 = vpop.f32.mrf.mxu0
        %v1564 = vadd.f32 %v1475, %v1563
        %1565 = vdwg.mxu0
        %1566 = vmatpush.msra.mxu0 %v1362
        %1567 = vmatpush.msra.mxu0 %v1360
        %1568 = vmatpush.msra.mxu0 %v1358
        %1569 = vmatpush.msra.mxu0 %v1356
        %1570 = vmatpush.msra.mxu0 %v1354
        %1571 = vmatpush.msra.mxu0 %v1352
        %1572 = vmatpush.msra.mxu0 %v1350
        %1573 = vmatpush.msra.mxu0 %v1348
        %1574 = vmatpush.msra.mxu0 %v1346
        %1575 = vmatpush.msra.mxu0 %v1344
        %1576 = vmatpush.msra.mxu0 %v1342
        %1577 = vmatpush.msra.mxu0 %v1340
        %1578 = vmatpush.msra.mxu0 %v1338
        %1579 = vmatpush.msra.mxu0 %v1336
        %1580 = vmatpush.msra.mxu0 %v1334
        %1581 = vmatpush.msra.mxu0 %v1332
        %1582 = vmatmul.f32.gmra.mxu0 %v1534
        %v1583 = vpop.f32.mrf.mxu0
        %v1584 = vadd.f32 %v1561, %v1583
        %1585 = vmatmul.f32.gmra.mxu0 %v1538
        %v1586 = vpop.f32.mrf.mxu0
        %v1587 = vadd.f32 %v1564, %v1586
        %1588 = vdwg.mxu0
        %1589 = vmatpush.msra.mxu0 %v1331
        %1590 = vmatpush.msra.mxu0 %v1329
        %1591 = vmatpush.msra.mxu0 %v1327
        %1592 = vmatpush.msra.mxu0 %v1325
        %1593 = vmatpush.msra.mxu0 %v1323
        %1594 = vmatpush.msra.mxu0 %v1321
        %1595 = vmatpush.msra.mxu0 %v1319
        %1596 = vmatpush.msra.mxu0 %v1317
        %1597 = vmatpush.msra.mxu0 %v1315
        %1598 = vmatpush.msra.mxu0 %v1313
        %1599 = vmatpush.msra.mxu0 %v1311
        %1600 = vmatpush.msra.mxu0 %v1309
        %1601 = vmatpush.msra.mxu0 %v1307
        %1602 = vmatpush.msra.mxu0 %v1305
        %1603 = vmatpush.msra.mxu0 %v1303
        %1604 = vmatpush.msra.mxu0 %v1301
        %1605 = vmatmul.f32.gmra.mxu0 %v1531
        %v1606 = vpop.f32.mrf.mxu0
        %v1607 = vadd.f32 %v1518, %v1606
        %1608 = vmatmul.f32.gmra.mxu0 %v1536
        %v1609 = vpop.f32.mrf.mxu0
        %v1610 = vadd.f32 %v1521, %v1609
        %1611 = vdwg.mxu0
        %1612 = vmatpush.msra.mxu0 %v1363
        %1613 = vmatpush.msra.mxu0 %v1361
        %1614 = vmatpush.msra.mxu0 %v1359
        %1615 = vmatpush.msra.mxu0 %v1357
        %1616 = vmatpush.msra.mxu0 %v1355
        %1617 = vmatpush.msra.mxu0 %v1353
        %1618 = vmatpush.msra.mxu0 %v1351
        %1619 = vmatpush.msra.mxu0 %v1349
        %1620 = vmatpush.msra.mxu0 %v1347
        %1621 = vmatpush.msra.mxu0 %v1345
        %1622 = vmatpush.msra.mxu0 %v1343
        %1623 = vmatpush.msra.mxu0 %v1341
        %1624 = vmatpush.msra.mxu0 %v1339
        %1625 = vmatpush.msra.mxu0 %v1337
        %1626 = vmatpush.msra.mxu0 %v1335
        %1627 = vmatpush.msra.mxu0 %v1333
        %1628 = vmatmul.f32.gmra.mxu0 %v1534
        %v1629 = vpop.f32.mrf.mxu0
        %v1630 = vadd.f32 %v1607, %v1629
        %1631 = vmatmul.f32.gmra.mxu0 %v1538
        %v1632 = vpop.f32.mrf.mxu0
        %v1633 = vadd.f32 %v1610, %v1632
        %1634 = vdwg.mxu0
        %v1635 = vld [vmem:[#allocation3 + $0x10] sm:$0xfe]
        %v1636 = vld [vmem:[#allocation3 + $0x18] sm:$0xfe]
        %v1637 = vld [vmem:[#allocation3 + $0x20] sm:$0xff]
        %v1638 = vld [vmem:[#allocation3 + $0x28] sm:$0xff]
        %v1639 = vld [vmem:[#allocation3 + $0x30] sm:$0x1]
        %v1640 = vld [vmem:[#allocation3 + $0x38] sm:$0x1]
        %s1641 = scalar_lea.vmem [#allocation13], 2560
        %v1642 = vld [vmem:[%s1641] sm:$0xff]
        %v1643 = vld [vmem:[%s1641 + $0x8] sm:$0xff]
        %v1644 = vld [vmem:[%s1641 + $0x10] sm:$0xff]
        %v1645 = vld [vmem:[%s1641 + $0x18] sm:$0xff]
        %v1646 = vld [vmem:[%s1641 + $0x20] sm:$0xff]
        %v1647 = vld [vmem:[%s1641 + $0x28] sm:$0xff]
        %v1648 = vld [vmem:[%s1641 + $0x30] sm:$0xff]
        %v1649 = vld [vmem:[%s1641 + $0x38] sm:$0xff]
        %v1650 = vld [vmem:[%s1641 + $0x40] sm:$0xff]
        %v1651 = vld [vmem:[%s1641 + $0x48] sm:$0xff]
        %v1652 = vld [vmem:[%s1641 + $0x50] sm:$0xff]
        %v1653 = vld [vmem:[%s1641 + $0x58] sm:$0xff]
        %v1654 = vld [vmem:[%s1641 + $0x60] sm:$0xff]
        %v1655 = vld [vmem:[%s1641 + $0x68] sm:$0xff]
        %v1656 = vld [vmem:[%s1641 + $0x70] sm:$0xff]
        %v1657 = vld [vmem:[%s1641 + $0x78] sm:$0xff]
        %v1658 = vld [vmem:[%s1641 + $0x80] sm:$0xff]
        %v1659 = vld [vmem:[%s1641 + $0x88] sm:$0xff]
        %v1660 = vld [vmem:[%s1641 + $0x90] sm:$0xff]
        %v1661 = vld [vmem:[%s1641 + $0x98] sm:$0xff]
        %v1662 = vld [vmem:[%s1641 + $0xa0] sm:$0xff]
        %v1663 = vld [vmem:[%s1641 + $0xa8] sm:$0xff]
        %v1664 = vld [vmem:[%s1641 + $0xb0] sm:$0xff]
        %v1665 = vld [vmem:[%s1641 + $0xb8] sm:$0xff]
        %v1666 = vld [vmem:[%s1641 + $0xc0] sm:$0xff]
        %v1667 = vld [vmem:[%s1641 + $0xc8] sm:$0xff]
        %v1668 = vld [vmem:[%s1641 + $0xd0] sm:$0xff]
        %v1669 = vld [vmem:[%s1641 + $0xd8] sm:$0xff]
        %v1670 = vld [vmem:[%s1641 + $0xe0] sm:$0xff]
        %v1671 = vld [vmem:[%s1641 + $0xe8] sm:$0xff]
        %v1672 = vld [vmem:[%s1641 + $0xf0] sm:$0xff]
        %v1673 = vld [vmem:[%s1641 + $0xf8] sm:$0xff]
        %v1674 = vld [vmem:[%s1641 + $0x100] sm:$0xff]
        %v1675 = vld [vmem:[%s1641 + $0x108] sm:$0xff]
        %v1676 = vld [vmem:[%s1641 + $0x110] sm:$0xff]
        %v1677 = vld [vmem:[%s1641 + $0x118] sm:$0xff]
        %v1678 = vld [vmem:[%s1641 + $0x120] sm:$0xff]
        %v1679 = vld [vmem:[%s1641 + $0x128] sm:$0xff]
        %v1680 = vld [vmem:[%s1641 + $0x130] sm:$0xff]
        %v1681 = vld [vmem:[%s1641 + $0x138] sm:$0xff]
        %v1682 = vld [vmem:[%s1641 + $0x140] sm:$0xff]
        %v1683 = vld [vmem:[%s1641 + $0x148] sm:$0xff]
        %v1684 = vld [vmem:[%s1641 + $0x150] sm:$0xff]
        %v1685 = vld [vmem:[%s1641 + $0x158] sm:$0xff]
        %v1686 = vld [vmem:[%s1641 + $0x160] sm:$0xff]
        %v1687 = vld [vmem:[%s1641 + $0x168] sm:$0xff]
        %v1688 = vld [vmem:[%s1641 + $0x170] sm:$0xff]
        %v1689 = vld [vmem:[%s1641 + $0x178] sm:$0xff]
        %v1690 = vld [vmem:[%s1641 + $0x180] sm:$0xff]
        %v1691 = vld [vmem:[%s1641 + $0x188] sm:$0xff]
        %v1692 = vld [vmem:[%s1641 + $0x190] sm:$0xff]
        %v1693 = vld [vmem:[%s1641 + $0x198] sm:$0xff]
        %v1694 = vld [vmem:[%s1641 + $0x1a0] sm:$0xff]
        %v1695 = vld [vmem:[%s1641 + $0x1a8] sm:$0xff]
        %v1696 = vld [vmem:[%s1641 + $0x1b0] sm:$0xff]
        %v1697 = vld [vmem:[%s1641 + $0x1b8] sm:$0xff]
        %v1698 = vld [vmem:[%s1641 + $0x1c0] sm:$0xff]
        %v1699 = vld [vmem:[%s1641 + $0x1c8] sm:$0xff]
        %v1700 = vld [vmem:[%s1641 + $0x1d0] sm:$0xff]
        %v1701 = vld [vmem:[%s1641 + $0x1d8] sm:$0xff]
        %v1702 = vld [vmem:[%s1641 + $0x1e0] sm:$0xff]
        %v1703 = vld [vmem:[%s1641 + $0x1e8] sm:$0xff]
        %v1704 = vld [vmem:[%s1641 + $0x1f0] sm:$0xff]
        %v1705 = vld [vmem:[%s1641 + $0x1f8] sm:$0xff]
        %v1712 = vrot.slane %v1635, 1
        %v1713 = vrot.slane %v1637, 1
        %v1714 = vsel %vm1138, %v1712, %v1713
        %v1715 = vrot.slane %v1636, 1
        %v1716 = vrot.slane %v1638, 1
        %v1717 = vsel %vm1138, %v1715, %v1716
        %v1718 = vrot.slane %v1639, 1
        %v1719 = vsel %vm1138, %v1713, %v1718
        %v1720 = vrot.slane %v1640, 1
        %v1721 = vsel %vm1138, %v1716, %v1720
        %1726 = vmatpush.msra.mxu0 %v1672
        %1727 = vmatpush.msra.mxu0 %v1670
        %1728 = vmatpush.msra.mxu0 %v1668
        %1729 = vmatpush.msra.mxu0 %v1666
        %1730 = vmatpush.msra.mxu0 %v1664
        %1731 = vmatpush.msra.mxu0 %v1662
        %1732 = vmatpush.msra.mxu0 %v1660
        %1733 = vmatpush.msra.mxu0 %v1658
        %1734 = vmatpush.msra.mxu0 %v1656
        %1735 = vmatpush.msra.mxu0 %v1654
        %1736 = vmatpush.msra.mxu0 %v1652
        %1737 = vmatpush.msra.mxu0 %v1650
        %1738 = vmatpush.msra.mxu0 %v1648
        %1739 = vmatpush.msra.mxu0 %v1646
        %1740 = vmatpush.msra.mxu0 %v1644
        %1741 = vmatpush.msra.mxu0 %v1642
        %1742 = vmatmul.f32.gmra.mxu0 %v1714
        %v1743 = vpop.f32.mrf.mxu0
        %v1744 = vadd.f32 0.0, %v1743
        %1745 = vmatmul.f32.gmra.mxu0 %v1719
        %v1746 = vpop.f32.mrf.mxu0
        %v1747 = vadd.f32 0.0, %v1746
        %1748 = vdwg.mxu0
        %1749 = vmatpush.msra.mxu0 %v1704
        %1750 = vmatpush.msra.mxu0 %v1702
        %1751 = vmatpush.msra.mxu0 %v1700
        %1752 = vmatpush.msra.mxu0 %v1698
        %1753 = vmatpush.msra.mxu0 %v1696
        %1754 = vmatpush.msra.mxu0 %v1694
        %1755 = vmatpush.msra.mxu0 %v1692
        %1756 = vmatpush.msra.mxu0 %v1690
        %1757 = vmatpush.msra.mxu0 %v1688
        %1758 = vmatpush.msra.mxu0 %v1686
        %1759 = vmatpush.msra.mxu0 %v1684
        %1760 = vmatpush.msra.mxu0 %v1682
        %1761 = vmatpush.msra.mxu0 %v1680
        %1762 = vmatpush.msra.mxu0 %v1678
        %1763 = vmatpush.msra.mxu0 %v1676
        %1764 = vmatpush.msra.mxu0 %v1674
        %1765 = vmatmul.f32.gmra.mxu0 %v1717
        %v1766 = vpop.f32.mrf.mxu0
        %v1767 = vadd.f32 %v1744, %v1766
        %1768 = vmatmul.f32.gmra.mxu0 %v1721
        %v1769 = vpop.f32.mrf.mxu0
        %v1770 = vadd.f32 %v1747, %v1769
        %1771 = vdwg.mxu0
        %1772 = vmatpush.msra.mxu0 %v1673
        %1773 = vmatpush.msra.mxu0 %v1671
        %1774 = vmatpush.msra.mxu0 %v1669
        %1775 = vmatpush.msra.mxu0 %v1667
        %1776 = vmatpush.msra.mxu0 %v1665
        %1777 = vmatpush.msra.mxu0 %v1663
        %1778 = vmatpush.msra.mxu0 %v1661
        %1779 = vmatpush.msra.mxu0 %v1659
        %1780 = vmatpush.msra.mxu0 %v1657
        %1781 = vmatpush.msra.mxu0 %v1655
        %1782 = vmatpush.msra.mxu0 %v1653
        %1783 = vmatpush.msra.mxu0 %v1651
        %1784 = vmatpush.msra.mxu0 %v1649
        %1785 = vmatpush.msra.mxu0 %v1647
        %1786 = vmatpush.msra.mxu0 %v1645
        %1787 = vmatpush.msra.mxu0 %v1643
        %1788 = vmatmul.f32.gmra.mxu0 %v1714
        %v1789 = vpop.f32.mrf.mxu0
        %v1790 = vadd.f32 0.0, %v1789
        %1791 = vmatmul.f32.gmra.mxu0 %v1719
        %v1792 = vpop.f32.mrf.mxu0
        %v1793 = vadd.f32 0.0, %v1792
        %1794 = vdwg.mxu0
        %1795 = vmatpush.msra.mxu0 %v1705
        %1796 = vmatpush.msra.mxu0 %v1703
        %1797 = vmatpush.msra.mxu0 %v1701
        %1798 = vmatpush.msra.mxu0 %v1699
        %1799 = vmatpush.msra.mxu0 %v1697
        %1800 = vmatpush.msra.mxu0 %v1695
        %1801 = vmatpush.msra.mxu0 %v1693
        %1802 = vmatpush.msra.mxu0 %v1691
        %1803 = vmatpush.msra.mxu0 %v1689
        %1804 = vmatpush.msra.mxu0 %v1687
        %1805 = vmatpush.msra.mxu0 %v1685
        %1806 = vmatpush.msra.mxu0 %v1683
        %1807 = vmatpush.msra.mxu0 %v1681
        %1808 = vmatpush.msra.mxu0 %v1679
        %1809 = vmatpush.msra.mxu0 %v1677
        %1810 = vmatpush.msra.mxu0 %v1675
        %1811 = vmatmul.f32.gmra.mxu0 %v1717
        %v1812 = vpop.f32.mrf.mxu0
        %v1813 = vadd.f32 %v1790, %v1812
        %1814 = vmatmul.f32.gmra.mxu0 %v1721
        %v1815 = vpop.f32.mrf.mxu0
        %v1816 = vadd.f32 %v1793, %v1815
        %1817 = vdwg.mxu0
        %v1818 = vadd.f32 %v1584, %v1767
        %v1819 = vadd.f32 %v1630, %v1813
        %v1820 = vadd.f32 %v1587, %v1770
        %v1821 = vadd.f32 %v1633, %v1816
        %s1822 = scalar_lea.vmem [#allocation15], 1
        %v1823 = vld [vmem:[%s1822] ss:$2 sm:$0x3]
        %v1825 = vperm.slane %v1823, 0
        %v1826 = vperm.slane %v1823, 1
        %v1829 = vmul.f32 %v1818, %v1825
        %v1830 = vmul.f32 %v1819, %v1826
        %v1831 = vmul.f32 %v1820, %v1825
        %v1832 = vmul.f32 %v1821, %v1826
        %s1833 = scalar_lea.vmem [#allocation16], 1
        %v1834 = vld [vmem:[%s1833] ss:$2 sm:$0x3]
        %v1836 = vperm.slane %v1834, 0
        %v1837 = vperm.slane %v1834, 1
        %v1840 = vadd.f32 %v1829, %v1836
        %v1841 = vadd.f32 %v1830, %v1837
        %v1842 = vadd.f32 %v1831, %v1836
        %v1843 = vadd.f32 %v1832, %v1837
        %v1844 = vadd.f32 %v671, %v1840
        %v1845 = vadd.f32 %v672, %v1841
        %v1846 = vadd.f32 %v673, %v1842
        %v1847 = vadd.f32 %v674, %v1843
        %vm1848 = vcmp.gt.f32.partialorder %v1844, 0.0
        %vm1849 = vcmp.gt.f32.partialorder %v1845, 0.0
        %vm1850 = vcmp.gt.f32.partialorder %v1846, 0.0
        %vm1851 = vcmp.gt.f32.partialorder %v1847, 0.0
        %v1852 = vmul.f32 %v1844, 1.442695
        %v1853 = vpow.pop %v1852
        %v1854 = vmul.f32 %v1845, 1.442695
        %v1855 = vpow.pop %v1854
        %v1856 = vmul.f32 %v1846, 1.442695
        %v1857 = vpow.pop %v1856
        %v1858 = vmul.f32 %v1847, 1.442695
        %v1859 = vpow.pop %v1858
        %v1860 = vsub.f32 %v1853, 1.0
        %v1861 = vsub.f32 %v1855, 1.0
        %v1862 = vsub.f32 %v1857, 1.0
        %v1863 = vsub.f32 %v1859, 1.0
        %v1864 = vsel %vm1848, %v1844, %v1860
        %v1865 = vsel %vm1849, %v1845, %v1861
        %v1866 = vsel %vm1850, %v1846, %v1862
        %v1867 = vsel %vm1851, %v1847, %v1863
        %1868 = vst [vmem:[%s431] sm:$0xff] %v1864
        %1869 = vst [vmem:[%s431 + $0x8] sm:$0xff] %v1865
        %1870 = vst [vmem:[%s431 + $0x10] sm:$0xff] %v1866
        %1871 = vst [vmem:[%s431 + $0x18] sm:$0xff] %v1867
        %s1872 = sand.u32 %s210, 1
        %s1873 = scalar_lea.sflag [#allocation6], %s1872
        %s1874 = sand.u32 %s210, 1
        %s1875 = smul.addr %s1874, 32
        %s1876 = scalar_lea.vmem [#allocation18], %s1875
        // Predicated region
        $region85: #{tpu_custom_call.1} parent=51 // pred_check
          %p1877 = pneg %p220
        $region86: #{tpu_custom_call.1} parent=51 // pred_check_branch
          %1879 = sbr.rel (%p1877) target = $region88
        $region87: #{tpu_custom_call.1} parent=51 // pred_region
          %1881 = vsyncadd %s1873, 0
          %s1882 = smul.addr %s29, 4
          %s1883 = smul.addr %s1882, 8
          %s1884 = scalar_lea.hbm %s8, %s1883
          %s1885 = sshll.u32 %s1876, 4
          %s1886 = int_to_ptr.vmem [resolvable:$true] %s1885
          %s1887 = sshll.u32 %s1884, 4
          %s1888 = int_to_ptr.hbm [resolvable:$true] %s1887
          %1893 = dma.vmem_to_hbm [thread:$0]  %s1886, 512, %s1888, %s1873, 256, 256, 16
        $region88: #{tpu_custom_call.1} parent=51 // pred_fallthru
          _
      $region52: #{tpu_custom_call.1} parent=5 // pred_fallthru
        _
      %p1894 = scmp.le.s32.totalorder 2, %s24
      // Predicated region
      $region89: #{tpu_custom_call.1} parent=5 // pred_check
        %p1895 = pneg %p1894
      $region90: #{tpu_custom_call.1} parent=5 // pred_check_branch
        %1897 = sbr.rel (%p1895) target = $region92
      $region91: #{tpu_custom_call.1} parent=5 // pred_region
        %s1898 = ssub.s32 %s24, 2
        // Predicated region
        $region93: #{tpu_custom_call.1} parent=91 // pred_check
          %p1899 = pneg %p226
        $region94: #{tpu_custom_call.1} parent=91 // pred_check_branch
          %1901 = sbr.rel (%p1899) target = $region96
        $region95: #{tpu_custom_call.1} parent=91 // pred_region
          %s1902 = sand.u32 %s211, 1
          %s1903 = scalar_lea.sflag [#allocation6], %s1902
          %s1904 = sand.u32 %s211, 1
          %s1905 = smul.addr %s1904, 32
          %s1906 = scalar_lea.vmem [#allocation18], %s1905
          %1908 = dma.done %s1903, 512
        $region96: #{tpu_custom_call.1} parent=91 // pred_fallthru
          _
      $region92: #{tpu_custom_call.1} parent=5 // pred_fallthru
        _
    $region6: #{tpu_custom_call.1} parent=1 // loop_footer
      %s28 = sadd.s32 1, %s24
    $region7: #{tpu_custom_call.1} parent=1 // loop_footer_branch
      %23 = sbr.rel target = $region3
    $region8: #{tpu_custom_call.1} parent=1 // loop_exit
      _
    %1909 = vsyncpa [#allocation5], 1
    %s1910 = scalar_lea.sflag [#allocation5], 1
    %1911 = vsyncpa %s1910, 1
    %1912 = vsyncpa [#allocation8], 1
    %1913 = vsyncpa [#allocation11], 1
    %1914 = vsyncpa [#allocation14], 1
    %1915 = vsyncpa [#allocation17], 1
    %1916 = vsyncpa [#allocation6], 1
    %s1917 = scalar_lea.sflag [#allocation6], 1
    %1918 = vsyncpa %s1917, 1

</llo_original>
